<compile_context>
chip_gen: v5e
topology: v5e:2x2
jax: 0.10.0
libtpu: 0.0.40
codegen_flags: <defaults>
</compile_context>

<pallas_src>
import math
import jax
import jax.numpy as jnp
from jax import lax
from jax.experimental import pallas as pl
from jax.experimental.pallas import tpu as pltpu

HIDDEN = 128          # hidden=128 (module default)
NHEAD = 8             # nhead=8 (hard-coded in AttnModule)
HEAD_DIM = HIDDEN // NHEAD
FFN = 512             # dim_feedforward=512 (hard-coded)
LAYERS = 8            # layers=8 (module default)
LN_EPS = 1e-5         # torch.nn.LayerNorm default eps

# packed-vector row indices (must match prepare_params)
_LN1G, _LN1B, _LN2G, _LN2B, _INB, _OUTB, _L1B, _L2B = range(8)


def _layer_norm(x, gamma, beta):
    # two-pass LN in f32 (avoids E[x^2]-E[x]^2 cancellation)
    mu = jnp.mean(x, axis=-1, keepdims=True)
    d = x - mu
    var = jnp.mean(d * d, axis=-1, keepdims=True)
    return d * lax.rsqrt(var + LN_EPS) * gamma + beta


# ---------------------------------------------------------------------------
# Fused kernel: pos-enc add + LAYERS pre-norm transformer layers
# ---------------------------------------------------------------------------
def _fused_forward_kernel(x_ref, pe_ref, vec_ref,
                          in_wT_ref, out_wT_ref, l1_wT_ref, l2_wT_ref,
                          o_ref):
    S = x_ref.shape[1]
    n_layers = vec_ref.shape[0]

    # layer-0 input: x + pe[batch]; pe broadcasts over the seq axis
    # (intentional reproduction of the original module's PE quirk).
    x0 = x_ref[0] + pe_ref[0]                           # [S, H] f32

    def layer_body(l, x):
        vecs = vec_ref[l]                               # [8, FFN] f32 packed
        ln1_g = vecs[_LN1G:_LN1G + 1, :HIDDEN]
        ln1_b = vecs[_LN1B:_LN1B + 1, :HIDDEN]
        ln2_g = vecs[_LN2G:_LN2G + 1, :HIDDEN]
        ln2_b = vecs[_LN2B:_LN2B + 1, :HIDDEN]
        in_b = vecs[_INB:_INB + 1, :3 * HIDDEN]
        out_b = vecs[_OUTB:_OUTB + 1, :HIDDEN]
        l1_b = vecs[_L1B:_L1B + 1, :]
        l2_b = vecs[_L2B:_L2B + 1, :HIDDEN]

        # ---- self-attention sub-block (pre-norm); dropout1 = identity ------
        xn = _layer_norm(x, ln1_g, ln1_b)
        qkv = jnp.dot(xn.astype(jnp.bfloat16), in_wT_ref[l],
                      preferred_element_type=jnp.float32) + in_b   # [S, 3H]
        qkv_b = qkv.astype(jnp.bfloat16)
        out_wT = out_wT_ref[l]                          # [H, H] bf16 resident

        attn = jnp.zeros((S, HIDDEN), jnp.float32)
        for h in range(NHEAD):                          # static head unroll
            q_sl = slice(h * HEAD_DIM, (h + 1) * HEAD_DIM)
            k_sl = slice(HIDDEN + h * HEAD_DIM, HIDDEN + (h + 1) * HEAD_DIM)
            v_sl = slice(2 * HIDDEN + h * HEAD_DIM,
                         2 * HIDDEN + (h + 1) * HEAD_DIM)
            qh = qkv_b[:, q_sl]          # 1/sqrt(head_dim) folded into in_w
            kh = qkv_b[:, k_sl]
            vh = qkv_b[:, v_sl]
            # q @ k^T contracting the last dims (no explicit .T relayout)
            s = lax.dot_general(qh, kh, (((1,), (1,)), ((), ())),
                                preferred_element_type=jnp.float32)   # [S, S]
            s = s - jnp.max(s, axis=-1, keepdims=True)
            p = jnp.exp(s)
            p = p * pl.reciprocal(jnp.sum(p, axis=-1, keepdims=True),
                                  approx=True)
            oh = jnp.dot(p.astype(jnp.bfloat16), vh,
                         preferred_element_type=jnp.float32)      # [S, HD]
            # fused out-projection: accumulate into a lane-dense [S, H] value
            # (out_wT row slice = aligned sublane slice of a bf16 128x128 tile)
            attn = attn + jnp.dot(oh.astype(jnp.bfloat16), out_wT[q_sl, :],
                                  preferred_element_type=jnp.float32)
        x = x + attn + out_b

        # ---- feed-forward sub-block (pre-norm); dropouts = identity --------
        xn = _layer_norm(x, ln2_g, ln2_b)
        h1 = jnp.dot(xn.astype(jnp.bfloat16), l1_wT_ref[l],
                     preferred_element_type=jnp.float32) + l1_b     # [S, FFN]
        h1 = jnp.maximum(h1, 0.0)                                   # relu
        h2 = jnp.dot(h1.astype(jnp.bfloat16), l2_wT_ref[l],
                     preferred_element_type=jnp.float32) + l2_b     # [S, H]
        return x + h2

    xL = lax.fori_loop(0, n_layers, layer_body, x0)
    o_ref[0] = xL.astype(o_ref.dtype)                  # one HBM writeback/row


def attn_module_forward(x, pe, stacked):
    """x: [B, S, HIDDEN] f32; pe: [max_len, 1, HIDDEN] f32; stacked: tuple of
    layer-stacked, pre-transposed, pre-scaled parameters (see prepare_params)."""
    B, S, H = x.shape
    vecs, in_wT, out_wT, l1_wT, l2_wT = stacked
    pe_b = pe[:B]                                       # [B, 1, H]

    batch_map = lambda b: (b, 0, 0)                     # per-batch blocks
    const_map = lambda b: (0, 0, 0)                     # VMEM-resident stacks

    in_specs = [
        pl.BlockSpec((1, S, H), batch_map),             # x
        pl.BlockSpec((1, 1, H), batch_map),             # pe[:B]
        pl.BlockSpec(vecs.shape, const_map),            # packed LN/bias vecs
        pl.BlockSpec(in_wT.shape, const_map),           # in_proj_w^T stack
        pl.BlockSpec(out_wT.shape, const_map),          # out_proj_w^T stack
        pl.BlockSpec(l1_wT.shape, const_map),           # linear1_w^T stack
        pl.BlockSpec(l2_wT.shape, const_map),           # linear2_w^T stack
    ]

    grid_spec = pltpu.PrefetchScalarGridSpec(
        num_scalar_prefetch=0,
        grid=(B,),
        in_specs=in_specs,
        out_specs=pl.BlockSpec((1, S, H), batch_map),
    )

    return pl.pallas_call(
        _fused_forward_kernel,
        out_shape=jax.ShapeDtypeStruct((B, S, H), jnp.float32),
        grid_spec=grid_spec,
        compiler_params=pltpu.CompilerParams(
            dimension_semantics=("parallel",),
            vmem_limit_bytes=32 * 1024 * 1024),
    )(x, pe_b, vecs, in_wT, out_wT, l1_wT, l2_wT)


# ---------------------------------------------------------------------------
# Parameter / buffer construction (deterministic, synthetic)
# ---------------------------------------------------------------------------
def make_positional_encoding(max_len=256, hidden=HIDDEN):
    position = jnp.arange(max_len, dtype=jnp.float32)[:, None]
    div_term = jnp.exp(jnp.arange(0, hidden, 2, dtype=jnp.float32)
                       * (-math.log(10000.0) / hidden))
    angles = position * div_term                        # [max_len, hidden//2]
    pe = jnp.zeros((max_len, 1, hidden), jnp.float32)
    pe = pe.at[:, 0, 0::2].set(jnp.sin(angles))
    pe = pe.at[:, 0, 1::2].set(jnp.cos(angles))
    return pe


def init_params(key, layers=LAYERS):
    """Per-layer parameters in PyTorch layout."""
    params = []
    for i in range(layers):
        ks = jax.random.split(jax.random.fold_in(key, i), 4)
        params.append(dict(
            ln1_g=jnp.ones((HIDDEN,), jnp.float32),
            ln1_b=jnp.zeros((HIDDEN,), jnp.float32),
            in_w=0.02 * jax.random.normal(ks[0], (3 * HIDDEN, HIDDEN), jnp.float32),
            in_b=jnp.zeros((3 * HIDDEN,), jnp.float32),
            out_w=0.02 * jax.random.normal(ks[1], (HIDDEN, HIDDEN), jnp.float32),
            out_b=jnp.zeros((HIDDEN,), jnp.float32),
            ln2_g=jnp.ones((HIDDEN,), jnp.float32),
            ln2_b=jnp.zeros((HIDDEN,), jnp.float32),
            l1_w=0.02 * jax.random.normal(ks[2], (FFN, HIDDEN), jnp.float32),
            l1_b=jnp.zeros((FFN,), jnp.float32),
            l2_w=0.02 * jax.random.normal(ks[3], (HIDDEN, FFN), jnp.float32),
            l2_b=jnp.zeros((HIDDEN,), jnp.float32),
        ))
    return params


def prepare_params(params):
    """Stack per-layer params on a leading L axis, pre-transpose the weight
    matrices (bf16), fold the 1/sqrt(head_dim) query scale into the in-proj
    weights/bias, and pack all small vectors (LN gammas/betas + biases) into a
    single [L, 8, FFN] f32 array."""
    scale = 1.0 / math.sqrt(HEAD_DIM)

    def pad_row(v):
        return jnp.pad(v, (0, FFN - v.shape[0]))

    vec_rows, in_wT, out_wT, l1_wT, l2_wT = [], [], [], [], []
    for p in params:
        in_w = p["in_w"].at[:HIDDEN].multiply(scale)     # fold q scale
        in_b = p["in_b"].at[:HIDDEN].multiply(scale)
        vec_rows.append(jnp.stack([
            pad_row(p["ln1_g"]), pad_row(p["ln1_b"]),
            pad_row(p["ln2_g"]), pad_row(p["ln2_b"]),
            pad_row(in_b), pad_row(p["out_b"]),
            pad_row(p["l1_b"]), pad_row(p["l2_b"]),
        ]))                                              # [8, FFN] f32
        in_wT.append(in_w.T.astype(jnp.bfloat16))        # [H, 3H]
        out_wT.append(p["out_w"].T.astype(jnp.bfloat16)) # [H, H]
        l1_wT.append(p["l1_w"].T.astype(jnp.bfloat16))   # [H, FFN]
        l2_wT.append(p["l2_w"].T.astype(jnp.bfloat16))   # [FFN, H]

    return (jnp.stack(vec_rows), jnp.stack(in_wT), jnp.stack(out_wT),
            jnp.stack(l1_wT), jnp.stack(l2_wT))


forward = jax.jit(attn_module_forward)


if __name__ == "__main__":
    key = jax.random.PRNGKey(0)
    B, S = 2, 16
    x = jax.random.normal(jax.random.fold_in(key, 123), (B, S, HIDDEN),
                          jnp.float32)

    pe = make_positional_encoding(max_len=256, hidden=HIDDEN)
    params = init_params(jax.random.fold_in(key, 7), layers=LAYERS)
    stacked = prepare_params(params)

    out = forward(x, pe, stacked)
    jax.block_until_ready(out)
    assert out.shape == (B, S, HIDDEN) and out.dtype == jnp.float32
    print("KERNEL_OK")
</pallas_src>

<mosaic_0001>
module attributes {stable_mosaic.version = 11 : i64} {
  func.func @_fused_forward_kernel(%arg0: i32, %arg1: memref<1x16x128xf32, #tpu.memory_space<vmem>>, %arg2: memref<1x1x128xf32, #tpu.memory_space<vmem>>, %arg3: memref<8x8x512xf32, #tpu.memory_space<vmem>>, %arg4: memref<8x128x384xbf16, #tpu.memory_space<vmem>>, %arg5: memref<8x128x128xbf16, #tpu.memory_space<vmem>>, %arg6: memref<8x128x512xbf16, #tpu.memory_space<vmem>>, %arg7: memref<8x512x128xbf16, #tpu.memory_space<vmem>>, %arg8: memref<1x16x128xf32, #tpu.memory_space<vmem>>) attributes {dimension_semantics = [#tpu.dimension_semantics<parallel>], iteration_bounds = array<i64: 2>, scalar_prefetch = 0 : i64, scratch_operands = 0 : i64, tpu.core_type = #tpu.core_type<tc>, window_params = [{transform_indices = @transform_0, window_bounds = array<i64: 1, 16, 128>}, {transform_indices = @transform_1, window_bounds = array<i64: 1, 1, 128>}, {pipeline_mode = #tpu.pipeline_mode<synchronous>, transform_indices = @transform_2, window_bounds = array<i64: 8, 8, 512>}, {pipeline_mode = #tpu.pipeline_mode<synchronous>, transform_indices = @transform_3, window_bounds = array<i64: 8, 128, 384>}, {pipeline_mode = #tpu.pipeline_mode<synchronous>, transform_indices = @transform_4, window_bounds = array<i64: 8, 128, 128>}, {pipeline_mode = #tpu.pipeline_mode<synchronous>, transform_indices = @transform_5, window_bounds = array<i64: 8, 128, 512>}, {pipeline_mode = #tpu.pipeline_mode<synchronous>, transform_indices = @transform_6, window_bounds = array<i64: 8, 512, 128>}, {transform_indices = @transform_7, window_bounds = array<i64: 1, 16, 128>}]} {
    %c0 = arith.constant 0 : index
    %c0_0 = arith.constant 0 : index
    %c0_1 = arith.constant 0 : index
    %0 = vector.load %arg1[%c0, %c0_0, %c0_1] : memref<1x16x128xf32, #tpu.memory_space<vmem>>, vector<1x16x128xf32>
    %1 = vector.shape_cast %0 : vector<1x16x128xf32> to vector<16x128xf32>
    %c0_2 = arith.constant 0 : index
    %c0_3 = arith.constant 0 : index
    %c0_4 = arith.constant 0 : index
    %2 = vector.load %arg2[%c0_2, %c0_3, %c0_4] : memref<1x1x128xf32, #tpu.memory_space<vmem>>, vector<1x1x128xf32>
    %3 = vector.shape_cast %2 : vector<1x1x128xf32> to vector<1x128xf32>
    %4 = vector.broadcast %3 : vector<1x128xf32> to vector<16x128xf32>
    %5 = arith.addf %1, %4 : vector<16x128xf32>
    %c0_i32 = arith.constant 0 : i32
    %c8_i32 = arith.constant 8 : i32
    %6 = arith.addi %c0_i32, %c8_i32 : i32
    %c1_i32 = arith.constant 1 : i32
    %7 = scf.for %arg9 = %c0_i32 to %6 step %c1_i32 iter_args(%arg10 = %5) -> (vector<16x128xf32>)  : i32 {
      %11 = arith.index_cast %arg9 : i32 to index
      %c0_9 = arith.constant 0 : index
      %c0_10 = arith.constant 0 : index
      %12 = vector.load %arg3[%11, %c0_9, %c0_10] : memref<8x8x512xf32, #tpu.memory_space<vmem>>, vector<1x8x512xf32>
      %13 = vector.shape_cast %12 : vector<1x8x512xf32> to vector<8x512xf32>
      %14 = vector.extract_strided_slice %13 {offsets = [0, 0], sizes = [1, 128], strides = [1, 1]} : vector<8x512xf32> to vector<1x128xf32>
      %15 = vector.extract_strided_slice %13 {offsets = [1, 0], sizes = [1, 128], strides = [1, 1]} : vector<8x512xf32> to vector<1x128xf32>
      %16 = vector.extract_strided_slice %13 {offsets = [2, 0], sizes = [1, 128], strides = [1, 1]} : vector<8x512xf32> to vector<1x128xf32>
      %17 = vector.extract_strided_slice %13 {offsets = [3, 0], sizes = [1, 128], strides = [1, 1]} : vector<8x512xf32> to vector<1x128xf32>
      %18 = vector.extract_strided_slice %13 {offsets = [4, 0], sizes = [1, 384], strides = [1, 1]} : vector<8x512xf32> to vector<1x384xf32>
      %19 = vector.extract_strided_slice %13 {offsets = [5, 0], sizes = [1, 128], strides = [1, 1]} : vector<8x512xf32> to vector<1x128xf32>
      %20 = vector.extract_strided_slice %13 {offsets = [6, 0], sizes = [1, 512], strides = [1, 1]} : vector<8x512xf32> to vector<1x512xf32>
      %21 = vector.extract_strided_slice %13 {offsets = [7, 0], sizes = [1, 128], strides = [1, 1]} : vector<8x512xf32> to vector<1x128xf32>
      %cst = arith.constant dense<0.000000e+00> : vector<16xf32>
      %22 = vector.multi_reduction <add>, %arg10, %cst [1] : vector<16x128xf32> to vector<16xf32>
      %23 = vector.shape_cast %22 : vector<16xf32> to vector<16x1xf32>
      %cst_11 = arith.constant 1.280000e+02 : f32
      %24 = vector.broadcast %cst_11 : f32 to vector<16x1xf32>
      %25 = arith.divf %23, %24 : vector<16x1xf32>
      %26 = vector.broadcast %25 : vector<16x1xf32> to vector<16x128xf32>
      %27 = arith.subf %arg10, %26 : vector<16x128xf32>
      %28 = arith.mulf %27, %27 : vector<16x128xf32>
      %cst_12 = arith.constant dense<0.000000e+00> : vector<16xf32>
      %29 = vector.multi_reduction <add>, %28, %cst_12 [1] : vector<16x128xf32> to vector<16xf32>
      %30 = vector.shape_cast %29 : vector<16xf32> to vector<16x1xf32>
      %cst_13 = arith.constant 1.280000e+02 : f32
      %31 = vector.broadcast %cst_13 : f32 to vector<16x1xf32>
      %32 = arith.divf %30, %31 : vector<16x1xf32>
      %cst_14 = arith.constant 9.99999974E-6 : f32
      %33 = vector.broadcast %cst_14 : f32 to vector<16x1xf32>
      %34 = arith.addf %32, %33 : vector<16x1xf32>
      %35 = math.rsqrt %34 : vector<16x1xf32>
      %36 = vector.broadcast %35 : vector<16x1xf32> to vector<16x128xf32>
      %37 = arith.mulf %27, %36 : vector<16x128xf32>
      %38 = vector.broadcast %14 : vector<1x128xf32> to vector<16x128xf32>
      %39 = arith.mulf %37, %38 : vector<16x128xf32>
      %40 = vector.broadcast %15 : vector<1x128xf32> to vector<16x128xf32>
      %41 = arith.addf %39, %40 : vector<16x128xf32>
      %42 = arith.truncf %41 : vector<16x128xf32> to vector<16x128xbf16>
      %43 = arith.index_cast %arg9 : i32 to index
      %c0_15 = arith.constant 0 : index
      %c0_16 = arith.constant 0 : index
      %44 = vector.load %arg4[%43, %c0_15, %c0_16] : memref<8x128x384xbf16, #tpu.memory_space<vmem>>, vector<1x128x384xbf16>
      %45 = vector.shape_cast %44 : vector<1x128x384xbf16> to vector<128x384xbf16>
      %cst_17 = arith.constant dense<0.000000e+00> : vector<16x384xf32>
      %46 = tpu.matmul %42, %45, %cst_17 {dimension_numbers = #tpu.dot_dimension_numbers<[1], [0], [0], [1], [0, 0, 1, 1], [], []>} : vector<16x128xbf16>, vector<128x384xbf16>, vector<16x384xf32> -> vector<16x384xf32>
      %47 = vector.broadcast %18 : vector<1x384xf32> to vector<16x384xf32>
      %48 = arith.addf %46, %47 : vector<16x384xf32>
      %49 = arith.truncf %48 : vector<16x384xf32> to vector<16x384xbf16>
      %50 = arith.index_cast %arg9 : i32 to index
      %c0_18 = arith.constant 0 : index
      %c0_19 = arith.constant 0 : index
      %51 = vector.load %arg5[%50, %c0_18, %c0_19] : memref<8x128x128xbf16, #tpu.memory_space<vmem>>, vector<1x128x128xbf16>
      %52 = vector.shape_cast %51 : vector<1x128x128xbf16> to vector<128x128xbf16>
      %cst_20 = arith.constant 0.000000e+00 : f32
      %53 = vector.broadcast %cst_20 : f32 to vector<16x128xf32>
      %54 = vector.extract_strided_slice %49 {offsets = [0, 0], sizes = [16, 16], strides = [1, 1]} : vector<16x384xbf16> to vector<16x16xbf16>
      %55 = vector.extract_strided_slice %49 {offsets = [0, 128], sizes = [16, 16], strides = [1, 1]} : vector<16x384xbf16> to vector<16x16xbf16>
      %56 = vector.extract_strided_slice %49 {offsets = [0, 256], sizes = [16, 16], strides = [1, 1]} : vector<16x384xbf16> to vector<16x16xbf16>
      %cst_21 = arith.constant dense<0.000000e+00> : vector<16x16xf32>
      %57 = tpu.matmul %54, %55, %cst_21 {dimension_numbers = #tpu.dot_dimension_numbers<[1], [1], [0], [0], [0, 0, 1, 0], [], []>} : vector<16x16xbf16>, vector<16x16xbf16>, vector<16x16xf32> -> vector<16x16xf32>
      %cst_22 = arith.constant dense<0xFF800000> : vector<16xf32>
      %58 = vector.multi_reduction <maximumf>, %57, %cst_22 [1] : vector<16x16xf32> to vector<16xf32>
      %59 = vector.shape_cast %58 : vector<16xf32> to vector<16x1xf32>
      %60 = vector.broadcast %59 : vector<16x1xf32> to vector<16x16xf32>
      %61 = arith.subf %57, %60 : vector<16x16xf32>
      %62 = math.exp %61 : vector<16x16xf32>
      %cst_23 = arith.constant dense<0.000000e+00> : vector<16xf32>
      %63 = vector.multi_reduction <add>, %62, %cst_23 [1] : vector<16x16xf32> to vector<16xf32>
      %64 = vector.shape_cast %63 : vector<16xf32> to vector<16x1xf32>
      %65 = tpu.reciprocal %64 {approx = true} : vector<16x1xf32> -> vector<16x1xf32>
      %66 = vector.broadcast %65 : vector<16x1xf32> to vector<16x16xf32>
      %67 = arith.mulf %62, %66 : vector<16x16xf32>
      %68 = arith.truncf %67 : vector<16x16xf32> to vector<16x16xbf16>
      %cst_24 = arith.constant dense<0.000000e+00> : vector<16x16xf32>
      %69 = tpu.matmul %68, %56, %cst_24 {dimension_numbers = #tpu.dot_dimension_numbers<[1], [0], [0], [1], [0, 0, 1, 1], [], []>} : vector<16x16xbf16>, vector<16x16xbf16>, vector<16x16xf32> -> vector<16x16xf32>
      %70 = arith.truncf %69 : vector<16x16xf32> to vector<16x16xbf16>
      %71 = vector.extract_strided_slice %52 {offsets = [0, 0], sizes = [16, 128], strides = [1, 1]} : vector<128x128xbf16> to vector<16x128xbf16>
      %cst_25 = arith.constant dense<0.000000e+00> : vector<16x128xf32>
      %72 = tpu.matmul %70, %71, %cst_25 {dimension_numbers = #tpu.dot_dimension_numbers<[1], [0], [0], [1], [0, 0, 1, 1], [], []>} : vector<16x16xbf16>, vector<16x128xbf16>, vector<16x128xf32> -> vector<16x128xf32>
      %73 = arith.addf %53, %72 : vector<16x128xf32>
      %74 = vector.extract_strided_slice %49 {offsets = [0, 16], sizes = [16, 16], strides = [1, 1]} : vector<16x384xbf16> to vector<16x16xbf16>
      %75 = vector.extract_strided_slice %49 {offsets = [0, 144], sizes = [16, 16], strides = [1, 1]} : vector<16x384xbf16> to vector<16x16xbf16>
      %76 = vector.extract_strided_slice %49 {offsets = [0, 272], sizes = [16, 16], strides = [1, 1]} : vector<16x384xbf16> to vector<16x16xbf16>
      %cst_26 = arith.constant dense<0.000000e+00> : vector<16x16xf32>
      %77 = tpu.matmul %74, %75, %cst_26 {dimension_numbers = #tpu.dot_dimension_numbers<[1], [1], [0], [0], [0, 0, 1, 0], [], []>} : vector<16x16xbf16>, vector<16x16xbf16>, vector<16x16xf32> -> vector<16x16xf32>
      %cst_27 = arith.constant dense<0xFF800000> : vector<16xf32>
      %78 = vector.multi_reduction <maximumf>, %77, %cst_27 [1] : vector<16x16xf32> to vector<16xf32>
      %79 = vector.shape_cast %78 : vector<16xf32> to vector<16x1xf32>
      %80 = vector.broadcast %79 : vector<16x1xf32> to vector<16x16xf32>
      %81 = arith.subf %77, %80 : vector<16x16xf32>
      %82 = math.exp %81 : vector<16x16xf32>
      %cst_28 = arith.constant dense<0.000000e+00> : vector<16xf32>
      %83 = vector.multi_reduction <add>, %82, %cst_28 [1] : vector<16x16xf32> to vector<16xf32>
      %84 = vector.shape_cast %83 : vector<16xf32> to vector<16x1xf32>
      %85 = tpu.reciprocal %84 {approx = true} : vector<16x1xf32> -> vector<16x1xf32>
      %86 = vector.broadcast %85 : vector<16x1xf32> to vector<16x16xf32>
      %87 = arith.mulf %82, %86 : vector<16x16xf32>
      %88 = arith.truncf %87 : vector<16x16xf32> to vector<16x16xbf16>
      %cst_29 = arith.constant dense<0.000000e+00> : vector<16x16xf32>
      %89 = tpu.matmul %88, %76, %cst_29 {dimension_numbers = #tpu.dot_dimension_numbers<[1], [0], [0], [1], [0, 0, 1, 1], [], []>} : vector<16x16xbf16>, vector<16x16xbf16>, vector<16x16xf32> -> vector<16x16xf32>
      %90 = arith.truncf %89 : vector<16x16xf32> to vector<16x16xbf16>
      %91 = vector.extract_strided_slice %52 {offsets = [16, 0], sizes = [16, 128], strides = [1, 1]} : vector<128x128xbf16> to vector<16x128xbf16>
      %cst_30 = arith.constant dense<0.000000e+00> : vector<16x128xf32>
      %92 = tpu.matmul %90, %91, %cst_30 {dimension_numbers = #tpu.dot_dimension_numbers<[1], [0], [0], [1], [0, 0, 1, 1], [], []>} : vector<16x16xbf16>, vector<16x128xbf16>, vector<16x128xf32> -> vector<16x128xf32>
      %93 = arith.addf %73, %92 : vector<16x128xf32>
      %94 = vector.extract_strided_slice %49 {offsets = [0, 32], sizes = [16, 16], strides = [1, 1]} : vector<16x384xbf16> to vector<16x16xbf16>
      %95 = vector.extract_strided_slice %49 {offsets = [0, 160], sizes = [16, 16], strides = [1, 1]} : vector<16x384xbf16> to vector<16x16xbf16>
      %96 = vector.extract_strided_slice %49 {offsets = [0, 288], sizes = [16, 16], strides = [1, 1]} : vector<16x384xbf16> to vector<16x16xbf16>
      %cst_31 = arith.constant dense<0.000000e+00> : vector<16x16xf32>
      %97 = tpu.matmul %94, %95, %cst_31 {dimension_numbers = #tpu.dot_dimension_numbers<[1], [1], [0], [0], [0, 0, 1, 0], [], []>} : vector<16x16xbf16>, vector<16x16xbf16>, vector<16x16xf32> -> vector<16x16xf32>
      %cst_32 = arith.constant dense<0xFF800000> : vector<16xf32>
      %98 = vector.multi_reduction <maximumf>, %97, %cst_32 [1] : vector<16x16xf32> to vector<16xf32>
      %99 = vector.shape_cast %98 : vector<16xf32> to vector<16x1xf32>
      %100 = vector.broadcast %99 : vector<16x1xf32> to vector<16x16xf32>
      %101 = arith.subf %97, %100 : vector<16x16xf32>
      %102 = math.exp %101 : vector<16x16xf32>
      %cst_33 = arith.constant dense<0.000000e+00> : vector<16xf32>
      %103 = vector.multi_reduction <add>, %102, %cst_33 [1] : vector<16x16xf32> to vector<16xf32>
      %104 = vector.shape_cast %103 : vector<16xf32> to vector<16x1xf32>
      %105 = tpu.reciprocal %104 {approx = true} : vector<16x1xf32> -> vector<16x1xf32>
      %106 = vector.broadcast %105 : vector<16x1xf32> to vector<16x16xf32>
      %107 = arith.mulf %102, %106 : vector<16x16xf32>
      %108 = arith.truncf %107 : vector<16x16xf32> to vector<16x16xbf16>
      %cst_34 = arith.constant dense<0.000000e+00> : vector<16x16xf32>
      %109 = tpu.matmul %108, %96, %cst_34 {dimension_numbers = #tpu.dot_dimension_numbers<[1], [0], [0], [1], [0, 0, 1, 1], [], []>} : vector<16x16xbf16>, vector<16x16xbf16>, vector<16x16xf32> -> vector<16x16xf32>
      %110 = arith.truncf %109 : vector<16x16xf32> to vector<16x16xbf16>
      %111 = vector.extract_strided_slice %52 {offsets = [32, 0], sizes = [16, 128], strides = [1, 1]} : vector<128x128xbf16> to vector<16x128xbf16>
      %cst_35 = arith.constant dense<0.000000e+00> : vector<16x128xf32>
      %112 = tpu.matmul %110, %111, %cst_35 {dimension_numbers = #tpu.dot_dimension_numbers<[1], [0], [0], [1], [0, 0, 1, 1], [], []>} : vector<16x16xbf16>, vector<16x128xbf16>, vector<16x128xf32> -> vector<16x128xf32>
      %113 = arith.addf %93, %112 : vector<16x128xf32>
      %114 = vector.extract_strided_slice %49 {offsets = [0, 48], sizes = [16, 16], strides = [1, 1]} : vector<16x384xbf16> to vector<16x16xbf16>
      %115 = vector.extract_strided_slice %49 {offsets = [0, 176], sizes = [16, 16], strides = [1, 1]} : vector<16x384xbf16> to vector<16x16xbf16>
      %116 = vector.extract_strided_slice %49 {offsets = [0, 304], sizes = [16, 16], strides = [1, 1]} : vector<16x384xbf16> to vector<16x16xbf16>
      %cst_36 = arith.constant dense<0.000000e+00> : vector<16x16xf32>
      %117 = tpu.matmul %114, %115, %cst_36 {dimension_numbers = #tpu.dot_dimension_numbers<[1], [1], [0], [0], [0, 0, 1, 0], [], []>} : vector<16x16xbf16>, vector<16x16xbf16>, vector<16x16xf32> -> vector<16x16xf32>
      %cst_37 = arith.constant dense<0xFF800000> : vector<16xf32>
      %118 = vector.multi_reduction <maximumf>, %117, %cst_37 [1] : vector<16x16xf32> to vector<16xf32>
      %119 = vector.shape_cast %118 : vector<16xf32> to vector<16x1xf32>
      %120 = vector.broadcast %119 : vector<16x1xf32> to vector<16x16xf32>
      %121 = arith.subf %117, %120 : vector<16x16xf32>
      %122 = math.exp %121 : vector<16x16xf32>
      %cst_38 = arith.constant dense<0.000000e+00> : vector<16xf32>
      %123 = vector.multi_reduction <add>, %122, %cst_38 [1] : vector<16x16xf32> to vector<16xf32>
      %124 = vector.shape_cast %123 : vector<16xf32> to vector<16x1xf32>
      %125 = tpu.reciprocal %124 {approx = true} : vector<16x1xf32> -> vector<16x1xf32>
      %126 = vector.broadcast %125 : vector<16x1xf32> to vector<16x16xf32>
      %127 = arith.mulf %122, %126 : vector<16x16xf32>
      %128 = arith.truncf %127 : vector<16x16xf32> to vector<16x16xbf16>
      %cst_39 = arith.constant dense<0.000000e+00> : vector<16x16xf32>
      %129 = tpu.matmul %128, %116, %cst_39 {dimension_numbers = #tpu.dot_dimension_numbers<[1], [0], [0], [1], [0, 0, 1, 1], [], []>} : vector<16x16xbf16>, vector<16x16xbf16>, vector<16x16xf32> -> vector<16x16xf32>
      %130 = arith.truncf %129 : vector<16x16xf32> to vector<16x16xbf16>
      %131 = vector.extract_strided_slice %52 {offsets = [48, 0], sizes = [16, 128], strides = [1, 1]} : vector<128x128xbf16> to vector<16x128xbf16>
      %cst_40 = arith.constant dense<0.000000e+00> : vector<16x128xf32>
      %132 = tpu.matmul %130, %131, %cst_40 {dimension_numbers = #tpu.dot_dimension_numbers<[1], [0], [0], [1], [0, 0, 1, 1], [], []>} : vector<16x16xbf16>, vector<16x128xbf16>, vector<16x128xf32> -> vector<16x128xf32>
      %133 = arith.addf %113, %132 : vector<16x128xf32>
      %134 = vector.extract_strided_slice %49 {offsets = [0, 64], sizes = [16, 16], strides = [1, 1]} : vector<16x384xbf16> to vector<16x16xbf16>
      %135 = vector.extract_strided_slice %49 {offsets = [0, 192], sizes = [16, 16], strides = [1, 1]} : vector<16x384xbf16> to vector<16x16xbf16>
      %136 = vector.extract_strided_slice %49 {offsets = [0, 320], sizes = [16, 16], strides = [1, 1]} : vector<16x384xbf16> to vector<16x16xbf16>
      %cst_41 = arith.constant dense<0.000000e+00> : vector<16x16xf32>
      %137 = tpu.matmul %134, %135, %cst_41 {dimension_numbers = #tpu.dot_dimension_numbers<[1], [1], [0], [0], [0, 0, 1, 0], [], []>} : vector<16x16xbf16>, vector<16x16xbf16>, vector<16x16xf32> -> vector<16x16xf32>
      %cst_42 = arith.constant dense<0xFF800000> : vector<16xf32>
      %138 = vector.multi_reduction <maximumf>, %137, %cst_42 [1] : vector<16x16xf32> to vector<16xf32>
      %139 = vector.shape_cast %138 : vector<16xf32> to vector<16x1xf32>
      %140 = vector.broadcast %139 : vector<16x1xf32> to vector<16x16xf32>
      %141 = arith.subf %137, %140 : vector<16x16xf32>
      %142 = math.exp %141 : vector<16x16xf32>
      %cst_43 = arith.constant dense<0.000000e+00> : vector<16xf32>
      %143 = vector.multi_reduction <add>, %142, %cst_43 [1] : vector<16x16xf32> to vector<16xf32>
      %144 = vector.shape_cast %143 : vector<16xf32> to vector<16x1xf32>
      %145 = tpu.reciprocal %144 {approx = true} : vector<16x1xf32> -> vector<16x1xf32>
      %146 = vector.broadcast %145 : vector<16x1xf32> to vector<16x16xf32>
      %147 = arith.mulf %142, %146 : vector<16x16xf32>
      %148 = arith.truncf %147 : vector<16x16xf32> to vector<16x16xbf16>
      %cst_44 = arith.constant dense<0.000000e+00> : vector<16x16xf32>
      %149 = tpu.matmul %148, %136, %cst_44 {dimension_numbers = #tpu.dot_dimension_numbers<[1], [0], [0], [1], [0, 0, 1, 1], [], []>} : vector<16x16xbf16>, vector<16x16xbf16>, vector<16x16xf32> -> vector<16x16xf32>
      %150 = arith.truncf %149 : vector<16x16xf32> to vector<16x16xbf16>
      %151 = vector.extract_strided_slice %52 {offsets = [64, 0], sizes = [16, 128], strides = [1, 1]} : vector<128x128xbf16> to vector<16x128xbf16>
      %cst_45 = arith.constant dense<0.000000e+00> : vector<16x128xf32>
      %152 = tpu.matmul %150, %151, %cst_45 {dimension_numbers = #tpu.dot_dimension_numbers<[1], [0], [0], [1], [0, 0, 1, 1], [], []>} : vector<16x16xbf16>, vector<16x128xbf16>, vector<16x128xf32> -> vector<16x128xf32>
      %153 = arith.addf %133, %152 : vector<16x128xf32>
      %154 = vector.extract_strided_slice %49 {offsets = [0, 80], sizes = [16, 16], strides = [1, 1]} : vector<16x384xbf16> to vector<16x16xbf16>
      %155 = vector.extract_strided_slice %49 {offsets = [0, 208], sizes = [16, 16], strides = [1, 1]} : vector<16x384xbf16> to vector<16x16xbf16>
      %156 = vector.extract_strided_slice %49 {offsets = [0, 336], sizes = [16, 16], strides = [1, 1]} : vector<16x384xbf16> to vector<16x16xbf16>
      %cst_46 = arith.constant dense<0.000000e+00> : vector<16x16xf32>
      %157 = tpu.matmul %154, %155, %cst_46 {dimension_numbers = #tpu.dot_dimension_numbers<[1], [1], [0], [0], [0, 0, 1, 0], [], []>} : vector<16x16xbf16>, vector<16x16xbf16>, vector<16x16xf32> -> vector<16x16xf32>
      %cst_47 = arith.constant dense<0xFF800000> : vector<16xf32>
      %158 = vector.multi_reduction <maximumf>, %157, %cst_47 [1] : vector<16x16xf32> to vector<16xf32>
      %159 = vector.shape_cast %158 : vector<16xf32> to vector<16x1xf32>
      %160 = vector.broadcast %159 : vector<16x1xf32> to vector<16x16xf32>
      %161 = arith.subf %157, %160 : vector<16x16xf32>
      %162 = math.exp %161 : vector<16x16xf32>
      %cst_48 = arith.constant dense<0.000000e+00> : vector<16xf32>
      %163 = vector.multi_reduction <add>, %162, %cst_48 [1] : vector<16x16xf32> to vector<16xf32>
      %164 = vector.shape_cast %163 : vector<16xf32> to vector<16x1xf32>
      %165 = tpu.reciprocal %164 {approx = true} : vector<16x1xf32> -> vector<16x1xf32>
      %166 = vector.broadcast %165 : vector<16x1xf32> to vector<16x16xf32>
      %167 = arith.mulf %162, %166 : vector<16x16xf32>
      %168 = arith.truncf %167 : vector<16x16xf32> to vector<16x16xbf16>
      %cst_49 = arith.constant dense<0.000000e+00> : vector<16x16xf32>
      %169 = tpu.matmul %168, %156, %cst_49 {dimension_numbers = #tpu.dot_dimension_numbers<[1], [0], [0], [1], [0, 0, 1, 1], [], []>} : vector<16x16xbf16>, vector<16x16xbf16>, vector<16x16xf32> -> vector<16x16xf32>
      %170 = arith.truncf %169 : vector<16x16xf32> to vector<16x16xbf16>
      %171 = vector.extract_strided_slice %52 {offsets = [80, 0], sizes = [16, 128], strides = [1, 1]} : vector<128x128xbf16> to vector<16x128xbf16>
      %cst_50 = arith.constant dense<0.000000e+00> : vector<16x128xf32>
      %172 = tpu.matmul %170, %171, %cst_50 {dimension_numbers = #tpu.dot_dimension_numbers<[1], [0], [0], [1], [0, 0, 1, 1], [], []>} : vector<16x16xbf16>, vector<16x128xbf16>, vector<16x128xf32> -> vector<16x128xf32>
      %173 = arith.addf %153, %172 : vector<16x128xf32>
      %174 = vector.extract_strided_slice %49 {offsets = [0, 96], sizes = [16, 16], strides = [1, 1]} : vector<16x384xbf16> to vector<16x16xbf16>
      %175 = vector.extract_strided_slice %49 {offsets = [0, 224], sizes = [16, 16], strides = [1, 1]} : vector<16x384xbf16> to vector<16x16xbf16>
      %176 = vector.extract_strided_slice %49 {offsets = [0, 352], sizes = [16, 16], strides = [1, 1]} : vector<16x384xbf16> to vector<16x16xbf16>
      %cst_51 = arith.constant dense<0.000000e+00> : vector<16x16xf32>
      %177 = tpu.matmul %174, %175, %cst_51 {dimension_numbers = #tpu.dot_dimension_numbers<[1], [1], [0], [0], [0, 0, 1, 0], [], []>} : vector<16x16xbf16>, vector<16x16xbf16>, vector<16x16xf32> -> vector<16x16xf32>
      %cst_52 = arith.constant dense<0xFF800000> : vector<16xf32>
      %178 = vector.multi_reduction <maximumf>, %177, %cst_52 [1] : vector<16x16xf32> to vector<16xf32>
      %179 = vector.shape_cast %178 : vector<16xf32> to vector<16x1xf32>
      %180 = vector.broadcast %179 : vector<16x1xf32> to vector<16x16xf32>
      %181 = arith.subf %177, %180 : vector<16x16xf32>
      %182 = math.exp %181 : vector<16x16xf32>
      %cst_53 = arith.constant dense<0.000000e+00> : vector<16xf32>
      %183 = vector.multi_reduction <add>, %182, %cst_53 [1] : vector<16x16xf32> to vector<16xf32>
      %184 = vector.shape_cast %183 : vector<16xf32> to vector<16x1xf32>
      %185 = tpu.reciprocal %184 {approx = true} : vector<16x1xf32> -> vector<16x1xf32>
      %186 = vector.broadcast %185 : vector<16x1xf32> to vector<16x16xf32>
      %187 = arith.mulf %182, %186 : vector<16x16xf32>
      %188 = arith.truncf %187 : vector<16x16xf32> to vector<16x16xbf16>
      %cst_54 = arith.constant dense<0.000000e+00> : vector<16x16xf32>
      %189 = tpu.matmul %188, %176, %cst_54 {dimension_numbers = #tpu.dot_dimension_numbers<[1], [0], [0], [1], [0, 0, 1, 1], [], []>} : vector<16x16xbf16>, vector<16x16xbf16>, vector<16x16xf32> -> vector<16x16xf32>
      %190 = arith.truncf %189 : vector<16x16xf32> to vector<16x16xbf16>
      %191 = vector.extract_strided_slice %52 {offsets = [96, 0], sizes = [16, 128], strides = [1, 1]} : vector<128x128xbf16> to vector<16x128xbf16>
      %cst_55 = arith.constant dense<0.000000e+00> : vector<16x128xf32>
      %192 = tpu.matmul %190, %191, %cst_55 {dimension_numbers = #tpu.dot_dimension_numbers<[1], [0], [0], [1], [0, 0, 1, 1], [], []>} : vector<16x16xbf16>, vector<16x128xbf16>, vector<16x128xf32> -> vector<16x128xf32>
      %193 = arith.addf %173, %192 : vector<16x128xf32>
      %194 = vector.extract_strided_slice %49 {offsets = [0, 112], sizes = [16, 16], strides = [1, 1]} : vector<16x384xbf16> to vector<16x16xbf16>
      %195 = vector.extract_strided_slice %49 {offsets = [0, 240], sizes = [16, 16], strides = [1, 1]} : vector<16x384xbf16> to vector<16x16xbf16>
      %196 = vector.extract_strided_slice %49 {offsets = [0, 368], sizes = [16, 16], strides = [1, 1]} : vector<16x384xbf16> to vector<16x16xbf16>
      %cst_56 = arith.constant dense<0.000000e+00> : vector<16x16xf32>
      %197 = tpu.matmul %194, %195, %cst_56 {dimension_numbers = #tpu.dot_dimension_numbers<[1], [1], [0], [0], [0, 0, 1, 0], [], []>} : vector<16x16xbf16>, vector<16x16xbf16>, vector<16x16xf32> -> vector<16x16xf32>
      %cst_57 = arith.constant dense<0xFF800000> : vector<16xf32>
      %198 = vector.multi_reduction <maximumf>, %197, %cst_57 [1] : vector<16x16xf32> to vector<16xf32>
      %199 = vector.shape_cast %198 : vector<16xf32> to vector<16x1xf32>
      %200 = vector.broadcast %199 : vector<16x1xf32> to vector<16x16xf32>
      %201 = arith.subf %197, %200 : vector<16x16xf32>
      %202 = math.exp %201 : vector<16x16xf32>
      %cst_58 = arith.constant dense<0.000000e+00> : vector<16xf32>
      %203 = vector.multi_reduction <add>, %202, %cst_58 [1] : vector<16x16xf32> to vector<16xf32>
      %204 = vector.shape_cast %203 : vector<16xf32> to vector<16x1xf32>
      %205 = tpu.reciprocal %204 {approx = true} : vector<16x1xf32> -> vector<16x1xf32>
      %206 = vector.broadcast %205 : vector<16x1xf32> to vector<16x16xf32>
      %207 = arith.mulf %202, %206 : vector<16x16xf32>
      %208 = arith.truncf %207 : vector<16x16xf32> to vector<16x16xbf16>
      %cst_59 = arith.constant dense<0.000000e+00> : vector<16x16xf32>
      %209 = tpu.matmul %208, %196, %cst_59 {dimension_numbers = #tpu.dot_dimension_numbers<[1], [0], [0], [1], [0, 0, 1, 1], [], []>} : vector<16x16xbf16>, vector<16x16xbf16>, vector<16x16xf32> -> vector<16x16xf32>
      %210 = arith.truncf %209 : vector<16x16xf32> to vector<16x16xbf16>
      %211 = vector.extract_strided_slice %52 {offsets = [112, 0], sizes = [16, 128], strides = [1, 1]} : vector<128x128xbf16> to vector<16x128xbf16>
      %cst_60 = arith.constant dense<0.000000e+00> : vector<16x128xf32>
      %212 = tpu.matmul %210, %211, %cst_60 {dimension_numbers = #tpu.dot_dimension_numbers<[1], [0], [0], [1], [0, 0, 1, 1], [], []>} : vector<16x16xbf16>, vector<16x128xbf16>, vector<16x128xf32> -> vector<16x128xf32>
      %213 = arith.addf %193, %212 : vector<16x128xf32>
      %214 = arith.addf %arg10, %213 : vector<16x128xf32>
      %215 = vector.broadcast %19 : vector<1x128xf32> to vector<16x128xf32>
      %216 = arith.addf %214, %215 : vector<16x128xf32>
      %cst_61 = arith.constant dense<0.000000e+00> : vector<16xf32>
      %217 = vector.multi_reduction <add>, %216, %cst_61 [1] : vector<16x128xf32> to vector<16xf32>
      %218 = vector.shape_cast %217 : vector<16xf32> to vector<16x1xf32>
      %cst_62 = arith.constant 1.280000e+02 : f32
      %219 = vector.broadcast %cst_62 : f32 to vector<16x1xf32>
      %220 = arith.divf %218, %219 : vector<16x1xf32>
      %221 = vector.broadcast %220 : vector<16x1xf32> to vector<16x128xf32>
      %222 = arith.subf %216, %221 : vector<16x128xf32>
      %223 = arith.mulf %222, %222 : vector<16x128xf32>
      %cst_63 = arith.constant dense<0.000000e+00> : vector<16xf32>
      %224 = vector.multi_reduction <add>, %223, %cst_63 [1] : vector<16x128xf32> to vector<16xf32>
      %225 = vector.shape_cast %224 : vector<16xf32> to vector<16x1xf32>
      %cst_64 = arith.constant 1.280000e+02 : f32
      %226 = vector.broadcast %cst_64 : f32 to vector<16x1xf32>
      %227 = arith.divf %225, %226 : vector<16x1xf32>
      %cst_65 = arith.constant 9.99999974E-6 : f32
      %228 = vector.broadcast %cst_65 : f32 to vector<16x1xf32>
      %229 = arith.addf %227, %228 : vector<16x1xf32>
      %230 = math.rsqrt %229 : vector<16x1xf32>
      %231 = vector.broadcast %230 : vector<16x1xf32> to vector<16x128xf32>
      %232 = arith.mulf %222, %231 : vector<16x128xf32>
      %233 = vector.broadcast %16 : vector<1x128xf32> to vector<16x128xf32>
      %234 = arith.mulf %232, %233 : vector<16x128xf32>
      %235 = vector.broadcast %17 : vector<1x128xf32> to vector<16x128xf32>
      %236 = arith.addf %234, %235 : vector<16x128xf32>
      %237 = arith.truncf %236 : vector<16x128xf32> to vector<16x128xbf16>
      %238 = arith.index_cast %arg9 : i32 to index
      %c0_66 = arith.constant 0 : index
      %c0_67 = arith.constant 0 : index
      %239 = vector.load %arg6[%238, %c0_66, %c0_67] : memref<8x128x512xbf16, #tpu.memory_space<vmem>>, vector<1x128x512xbf16>
      %240 = vector.shape_cast %239 : vector<1x128x512xbf16> to vector<128x512xbf16>
      %cst_68 = arith.constant dense<0.000000e+00> : vector<16x512xf32>
      %241 = tpu.matmul %237, %240, %cst_68 {dimension_numbers = #tpu.dot_dimension_numbers<[1], [0], [0], [1], [0, 0, 1, 1], [], []>} : vector<16x128xbf16>, vector<128x512xbf16>, vector<16x512xf32> -> vector<16x512xf32>
      %242 = vector.broadcast %20 : vector<1x512xf32> to vector<16x512xf32>
      %243 = arith.addf %241, %242 : vector<16x512xf32>
      %cst_69 = arith.constant 0.000000e+00 : f32
      %244 = vector.broadcast %cst_69 : f32 to vector<16x512xf32>
      %245 = arith.maximumf %243, %244 : vector<16x512xf32>
      %246 = arith.truncf %245 : vector<16x512xf32> to vector<16x512xbf16>
      %247 = arith.index_cast %arg9 : i32 to index
      %c0_70 = arith.constant 0 : index
      %c0_71 = arith.constant 0 : index
      %248 = vector.load %arg7[%247, %c0_70, %c0_71] : memref<8x512x128xbf16, #tpu.memory_space<vmem>>, vector<1x512x128xbf16>
      %249 = vector.shape_cast %248 : vector<1x512x128xbf16> to vector<512x128xbf16>
      %cst_72 = arith.constant dense<0.000000e+00> : vector<16x128xf32>
      %250 = tpu.matmul %246, %249, %cst_72 {dimension_numbers = #tpu.dot_dimension_numbers<[1], [0], [0], [1], [0, 0, 1, 1], [], []>} : vector<16x512xbf16>, vector<512x128xbf16>, vector<16x128xf32> -> vector<16x128xf32>
      %251 = vector.broadcast %21 : vector<1x128xf32> to vector<16x128xf32>
      %252 = arith.addf %250, %251 : vector<16x128xf32>
      %253 = arith.addf %216, %252 : vector<16x128xf32>
      scf.yield %253 : vector<16x128xf32>
    }
    %c8_i32_5 = arith.constant 8 : i32
    %c0_6 = arith.constant 0 : index
    %c0_7 = arith.constant 0 : index
    %c0_8 = arith.constant 0 : index
    %8 = vector.load %arg8[%c0_6, %c0_7, %c0_8] : memref<1x16x128xf32, #tpu.memory_space<vmem>>, vector<1x16x128xf32>
    %9 = vector.shape_cast %8 : vector<1x16x128xf32> to vector<16x128xf32>
    %10 = vector.shape_cast %7 : vector<16x128xf32> to vector<1x16x128xf32>
    tpu.vector_store %arg8[%c0_6, %c0_7, %c0_8], %10 {strides = array<i32>} : memref<1x16x128xf32, #tpu.memory_space<vmem>>, vector<1x16x128xf32>,
    return
  }
  func.func @transform_0(%arg0: i32) -> (i32, i32, i32) {
    %c0_i32 = arith.constant 0 : i32
    %c0_i32_0 = arith.constant 0 : i32
    %c0_i32_1 = arith.constant 0 : i32
    return %arg0, %c0_i32, %c0_i32_0 : i32, i32, i32
  }
  func.func @transform_1(%arg0: i32) -> (i32, i32, i32) {
    %c0_i32 = arith.constant 0 : i32
    %c0_i32_0 = arith.constant 0 : i32
    %c0_i32_1 = arith.constant 0 : i32
    return %arg0, %c0_i32, %c0_i32_0 : i32, i32, i32
  }
  func.func @transform_2(%arg0: i32) -> (i32, i32, i32) {
    %c0_i32 = arith.constant 0 : i32
    %c0_i32_0 = arith.constant 0 : i32
    %c0_i32_1 = arith.constant 0 : i32
    %c0_i32_2 = arith.constant 0 : i32
    return %c0_i32, %c0_i32_0, %c0_i32_1 : i32, i32, i32
  }
  func.func @transform_3(%arg0: i32) -> (i32, i32, i32) {
    %c0_i32 = arith.constant 0 : i32
    %c0_i32_0 = arith.constant 0 : i32
    %c0_i32_1 = arith.constant 0 : i32
    %c0_i32_2 = arith.constant 0 : i32
    return %c0_i32, %c0_i32_0, %c0_i32_1 : i32, i32, i32
  }
  func.func @transform_4(%arg0: i32) -> (i32, i32, i32) {
    %c0_i32 = arith.constant 0 : i32
    %c0_i32_0 = arith.constant 0 : i32
    %c0_i32_1 = arith.constant 0 : i32
    %c0_i32_2 = arith.constant 0 : i32
    return %c0_i32, %c0_i32_0, %c0_i32_1 : i32, i32, i32
  }
  func.func @transform_5(%arg0: i32) -> (i32, i32, i32) {
    %c0_i32 = arith.constant 0 : i32
    %c0_i32_0 = arith.constant 0 : i32
    %c0_i32_1 = arith.constant 0 : i32
    %c0_i32_2 = arith.constant 0 : i32
    return %c0_i32, %c0_i32_0, %c0_i32_1 : i32, i32, i32
  }
  func.func @transform_6(%arg0: i32) -> (i32, i32, i32) {
    %c0_i32 = arith.constant 0 : i32
    %c0_i32_0 = arith.constant 0 : i32
    %c0_i32_1 = arith.constant 0 : i32
    %c0_i32_2 = arith.constant 0 : i32
    return %c0_i32, %c0_i32_0, %c0_i32_1 : i32, i32, i32
  }
  func.func @transform_7(%arg0: i32) -> (i32, i32, i32) {
    %c0_i32 = arith.constant 0 : i32
    %c0_i32_0 = arith.constant 0 : i32
    %c0_i32_1 = arith.constant 0 : i32
    return %arg0, %c0_i32, %c0_i32_0 : i32, i32, i32
  }
}

</mosaic_0001>

<llo_original>
// kernel: attn_module_forward.1
$region0: #{attn_module_forward.1}
  #allocation0 [shape = 'u32[]', space=smem, size = 0x4, offset = 0x4, fixed_abs, tag = 'smem constant byte address 0x4 - core index']
  #allocation1 [shape = 'u32[72,128]{1,0:T(1,128)}', space=vmem, size = 0x9000, scoped, tag = 'internal scratch']
  %s0 = inlined_call_operand.hbm [shape: f32[2,16,128], index: 0, kind: input, shape index: {}]
  %s1 = inlined_call_operand.vmem [shape: f32[2,1,128], index: 1, kind: input, shape index: {}]
  %s2 = inlined_call_operand.hbm [shape: f32[8,8,512], index: 2, kind: input, shape index: {}]
  %s3 = inlined_call_operand.hbm [shape: bf16[8,128,384], index: 3, kind: input, shape index: {}]
  %s4 = inlined_call_operand.hbm [shape: bf16[8,128,128], index: 4, kind: input, shape index: {}]
  %s5 = inlined_call_operand.hbm [shape: bf16[8,128,512], index: 5, kind: input, shape index: {}]
  %s6 = inlined_call_operand.hbm [shape: bf16[8,512,128], index: 6, kind: input, shape index: {}]
  %s7 = inlined_call_operand.hbm [shape: f32[2,16,128], index: 7, kind: output, shape index: {}]
  %s8 = sld [smem:[#allocation0]]
  $region92: #{attn_module_forward.1} parent=0
    _
  %s10 = ssub.s32 1, %s8
  %s11 = scalar_select 0, %s10, %s8
  $region1: #{attn_module_forward.1} parent=0
    #allocation2 [shape = 'u8[16384]{0}', space=vmem, size = 0x4000, scoped, tag = 'input window, operand 0']
    #allocation3 [shape = 's32[2]{0}', space=sflag, size = 0x8, scoped, tag = 'scoped memory for attn_module_forward.1']
    #allocation4 [shape = 's32[2]{0}', space=sflag, size = 0x8, scoped, tag = 'scoped memory for attn_module_forward.1']
    #allocation5 [shape = 'u8[131072]{0}', space=vmem, size = 0x20000, scoped, tag = 'input window, operand 2, single buffered']
    #allocation6 [shape = 's32[1]{0}', space=sflag, size = 0x4, scoped, tag = 'scoped memory for attn_module_forward.1']
    #allocation7 [shape = 'u8[786432]{0}', space=vmem, size = 0xc0000, scoped, tag = 'input window, operand 3, single buffered']
    #allocation8 [shape = 'u8[262144]{0}', space=vmem, size = 0x40000, scoped, tag = 'input window, operand 4, single buffered']
    #allocation9 [shape = 's32[1]{0}', space=sflag, size = 0x4, scoped, tag = 'scoped memory for attn_module_forward.1']
    #allocation10 [shape = 'u8[1048576]{0}', space=vmem, size = 0x100000, scoped, tag = 'input window, operand 5, single buffered']
    #allocation11 [shape = 'u8[1048576]{0}', space=vmem, size = 0x100000, scoped, tag = 'input window, operand 6, single buffered']
    #allocation12 [shape = 's32[1]{0}', space=sflag, size = 0x4, scoped, tag = 'scoped memory for attn_module_forward.1']
    #allocation13 [shape = 'u8[16384]{0}', space=vmem, size = 0x4000, scoped, tag = 'output window, operand 0']
    %12 = vsyncpa [#allocation3], 0
    %s13 = scalar_lea.sflag [#allocation3], 1
    %14 = vsyncpa %s13, 0
    %15 = vsyncpa [#allocation6], 0
    %16 = vsyncpa [#allocation9], 0
    %17 = vsyncpa [#allocation12], 0
    %18 = vsyncpa [#allocation4], 0
    %s19 = scalar_lea.sflag [#allocation4], 1
    %20 = vsyncpa %s19, 0
    loop: start=0, step=1, limit=4
    $region2: #{attn_module_forward.1} parent=1 // loop_pre_header
      _
    $region3: #{attn_module_forward.1} parent=1 // loop_header
      %s22 = sphi 0, %s26
      %p23 = scmp.ge.s32.totalorder %s22, 4
      %s32 = sphi 0, %s34
      %s35 = sphi 0, %s32
      %s36 = sphi 0, %s35
      %s52 = sphi 0, %s36
      %s58 = sphi 0, %s60
      %s61 = sphi 0, %s58
      %s62 = sphi 0, %s61
      %s78 = sphi 0, %s62
      %s82 = sphi 0, %s82
      %s84 = sphi 0, %s82
      %s85 = sphi 0, %s84
      %s99 = sphi 0, %s85
      %s103 = sphi 0, %s103
      %s105 = sphi 0, %s103
      %s106 = sphi 0, %s105
      %s120 = sphi 0, %s106
      %s124 = sphi 0, %s124
      %s126 = sphi 0, %s124
      %s127 = sphi 0, %s126
      %s141 = sphi 0, %s127
      %s145 = sphi 0, %s145
      %s147 = sphi 0, %s145
      %s148 = sphi 0, %s147
      %s162 = sphi 0, %s148
      %s166 = sphi 0, %s166
      %s168 = sphi 0, %s166
      %s169 = sphi 0, %s168
      %s183 = sphi 0, %s169
      %s189 = sphi 0, %s191
      %s192 = sphi 0, %s189
      %s193 = sphi 0, %s192
      %s209 = sphi 0, %s193
    $region4: #{attn_module_forward.1} parent=1 // loop_header_branch
      %25 = sbr.rel (%p23) target = $region8
    $region5: #{attn_module_forward.1} parent=1 // loop_body
      %s27 = ssub.s32 %s22, 1
      %s28 = ssub.s32 %s22, 2
      %s29 = sadd.s32 %s22, 1
      %s30 = ssub.s32 %s22, %s29
      %p31 = scmp.eq.s32.totalorder %s30, 0
      %s33 = sadd.s32 %s32, 1
      %s34 = scalar_select %p31, %s32, %s33
      %p37 = pneg %p31
      %p38 = scmp.eq.s32.totalorder %s22, 1
      %p39 = por %p37, %p38
      %p40 = scmp.ne.s32.totalorder %s32, %s35
      %p41 = scmp.eq.s32.totalorder %s22, 0
      %p42 = por %p40, %p41
      %p43 = scmp.ne.s32.totalorder %s32, %s35
      %p44 = scmp.eq.s32.totalorder %s27, 1
      %p45 = por %p43, %p44
      %p46 = scmp.ne.s32.totalorder %s35, %s36
      %p47 = scmp.eq.s32.totalorder %s27, 0
      %p48 = por %p46, %p47
      %p49 = scmp.ne.s32.totalorder %s35, %s36
      %p50 = scmp.eq.s32.totalorder %s28, 1
      %p51 = por %p49, %p50
      %p53 = scmp.ne.s32.totalorder %s36, %s52
      %p54 = scmp.eq.s32.totalorder %s28, 0
      %p55 = por %p53, %p54
      %s56 = ssub.s32 %s22, %s29
      %p57 = scmp.eq.s32.totalorder %s56, 0
      %s59 = sadd.s32 %s58, 1
      %s60 = scalar_select %p57, %s58, %s59
      %p63 = pneg %p57
      %p64 = scmp.eq.s32.totalorder %s22, 1
      %p65 = por %p63, %p64
      %p66 = scmp.ne.s32.totalorder %s58, %s61
      %p67 = scmp.eq.s32.totalorder %s22, 0
      %p68 = por %p66, %p67
      %p69 = scmp.ne.s32.totalorder %s58, %s61
      %p70 = scmp.eq.s32.totalorder %s27, 1
      %p71 = por %p69, %p70
      %p72 = scmp.ne.s32.totalorder %s61, %s62
      %p73 = scmp.eq.s32.totalorder %s27, 0
      %p74 = por %p72, %p73
      %p75 = scmp.ne.s32.totalorder %s61, %s62
      %p76 = scmp.eq.s32.totalorder %s28, 1
      %p77 = por %p75, %p76
      %p79 = scmp.ne.s32.totalorder %s62, %s78
      %p80 = scmp.eq.s32.totalorder %s28, 0
      %p81 = por %p79, %p80
      %s83 = sadd.s32 %s82, 1
      %p86 = scmp.eq.s32.totalorder %s22, 1
      %p87 = scmp.ne.s32.totalorder %s82, %s84
      %p88 = scmp.eq.s32.totalorder %s22, 0
      %p89 = por %p87, %p88
      %p90 = scmp.ne.s32.totalorder %s82, %s84
      %p91 = scmp.eq.s32.totalorder %s27, 1
      %p92 = por %p90, %p91
      %p93 = scmp.ne.s32.totalorder %s84, %s85
      %p94 = scmp.eq.s32.totalorder %s27, 0
      %p95 = por %p93, %p94
      %p96 = scmp.ne.s32.totalorder %s84, %s85
      %p97 = scmp.eq.s32.totalorder %s28, 1
      %p98 = por %p96, %p97
      %p100 = scmp.ne.s32.totalorder %s85, %s99
      %p101 = scmp.eq.s32.totalorder %s28, 0
      %p102 = por %p100, %p101
      %s104 = sadd.s32 %s103, 1
      %p107 = scmp.eq.s32.totalorder %s22, 1
      %p108 = scmp.ne.s32.totalorder %s103, %s105
      %p109 = scmp.eq.s32.totalorder %s22, 0
      %p110 = por %p108, %p109
      %p111 = scmp.ne.s32.totalorder %s103, %s105
      %p112 = scmp.eq.s32.totalorder %s27, 1
      %p113 = por %p111, %p112
      %p114 = scmp.ne.s32.totalorder %s105, %s106
      %p115 = scmp.eq.s32.totalorder %s27, 0
      %p116 = por %p114, %p115
      %p117 = scmp.ne.s32.totalorder %s105, %s106
      %p118 = scmp.eq.s32.totalorder %s28, 1
      %p119 = por %p117, %p118
      %p121 = scmp.ne.s32.totalorder %s106, %s120
      %p122 = scmp.eq.s32.totalorder %s28, 0
      %p123 = por %p121, %p122
      %s125 = sadd.s32 %s124, 1
      %p128 = scmp.eq.s32.totalorder %s22, 1
      %p129 = scmp.ne.s32.totalorder %s124, %s126
      %p130 = scmp.eq.s32.totalorder %s22, 0
      %p131 = por %p129, %p130
      %p132 = scmp.ne.s32.totalorder %s124, %s126
      %p133 = scmp.eq.s32.totalorder %s27, 1
      %p134 = por %p132, %p133
      %p135 = scmp.ne.s32.totalorder %s126, %s127
      %p136 = scmp.eq.s32.totalorder %s27, 0
      %p137 = por %p135, %p136
      %p138 = scmp.ne.s32.totalorder %s126, %s127
      %p139 = scmp.eq.s32.totalorder %s28, 1
      %p140 = por %p138, %p139
      %p142 = scmp.ne.s32.totalorder %s127, %s141
      %p143 = scmp.eq.s32.totalorder %s28, 0
      %p144 = por %p142, %p143
      %s146 = sadd.s32 %s145, 1
      %p149 = scmp.eq.s32.totalorder %s22, 1
      %p150 = scmp.ne.s32.totalorder %s145, %s147
      %p151 = scmp.eq.s32.totalorder %s22, 0
      %p152 = por %p150, %p151
      %p153 = scmp.ne.s32.totalorder %s145, %s147
      %p154 = scmp.eq.s32.totalorder %s27, 1
      %p155 = por %p153, %p154
      %p156 = scmp.ne.s32.totalorder %s147, %s148
      %p157 = scmp.eq.s32.totalorder %s27, 0
      %p158 = por %p156, %p157
      %p159 = scmp.ne.s32.totalorder %s147, %s148
      %p160 = scmp.eq.s32.totalorder %s28, 1
      %p161 = por %p159, %p160
      %p163 = scmp.ne.s32.totalorder %s148, %s162
      %p164 = scmp.eq.s32.totalorder %s28, 0
      %p165 = por %p163, %p164
      %s167 = sadd.s32 %s166, 1
      %p170 = scmp.eq.s32.totalorder %s22, 1
      %p171 = scmp.ne.s32.totalorder %s166, %s168
      %p172 = scmp.eq.s32.totalorder %s22, 0
      %p173 = por %p171, %p172
      %p174 = scmp.ne.s32.totalorder %s166, %s168
      %p175 = scmp.eq.s32.totalorder %s27, 1
      %p176 = por %p174, %p175
      %p177 = scmp.ne.s32.totalorder %s168, %s169
      %p178 = scmp.eq.s32.totalorder %s27, 0
      %p179 = por %p177, %p178
      %p180 = scmp.ne.s32.totalorder %s168, %s169
      %p181 = scmp.eq.s32.totalorder %s28, 1
      %p182 = por %p180, %p181
      %p184 = scmp.ne.s32.totalorder %s169, %s183
      %p185 = scmp.eq.s32.totalorder %s28, 0
      %p186 = por %p184, %p185
      %s187 = ssub.s32 %s22, %s29
      %p188 = scmp.eq.s32.totalorder %s187, 0
      %s190 = sadd.s32 %s189, 1
      %s191 = scalar_select %p188, %s189, %s190
      %p194 = pneg %p188
      %p195 = scmp.eq.s32.totalorder %s22, 1
      %p196 = por %p194, %p195
      %p197 = scmp.ne.s32.totalorder %s189, %s192
      %p198 = scmp.eq.s32.totalorder %s22, 0
      %p199 = por %p197, %p198
      %p200 = scmp.ne.s32.totalorder %s189, %s192
      %p201 = scmp.eq.s32.totalorder %s27, 1
      %p202 = por %p200, %p201
      %p203 = scmp.ne.s32.totalorder %s192, %s193
      %p204 = scmp.eq.s32.totalorder %s27, 0
      %p205 = por %p203, %p204
      %p206 = scmp.ne.s32.totalorder %s192, %s193
      %p207 = scmp.eq.s32.totalorder %s28, 1
      %p208 = por %p206, %p207
      %p210 = scmp.ne.s32.totalorder %s193, %s209
      %p211 = scmp.eq.s32.totalorder %s28, 0
      %p212 = por %p210, %p211
      %p213 = scmp.le.s32.totalorder 1, %s22
      %p214 = scmp.lt.s32.totalorder %s22, 3
      %p215 = pnand %p213, %p214
      %p216 = pneg %p215
      // Predicated region
      $region9: #{attn_module_forward.1} parent=5 // pred_check
        _
      $region10: #{attn_module_forward.1} parent=5 // pred_check_branch
        %218 = sbr.rel (%p215) target = $region12
      $region11: #{attn_module_forward.1} parent=5 // pred_region
        %s219 = ssub.s32 %s22, 1
        // Predicated region
        $region13: #{attn_module_forward.1} parent=11 // pred_check
          %p220 = pneg %p95
        $region14: #{attn_module_forward.1} parent=11 // pred_check_branch
          %222 = sbr.rel (%p220) target = $region16
        $region15: #{attn_module_forward.1} parent=11 // pred_region
          %224 = vsyncadd [#allocation6], 0
          %s225 = sshll.u32 %s2, 4
          %s226 = int_to_ptr.hbm [resolvable:$true] %s225
          %s227 = sshll.u32 [#allocation5], 4
          %s228 = int_to_ptr.vmem [resolvable:$true] %s227
          %233 = dma.hbm_to_vmem [thread:$0]  %s226, 4096, %s228, [#allocation6], 512, 512, 32
        $region16: #{attn_module_forward.1} parent=11 // pred_fallthru
          _
        // Predicated region
        $region17: #{attn_module_forward.1} parent=11 // pred_check
          %p234 = pneg %p116
        $region18: #{attn_module_forward.1} parent=11 // pred_check_branch
          %236 = sbr.rel (%p234) target = $region20
        $region19: #{attn_module_forward.1} parent=11 // pred_region
          %238 = vsyncadd [#allocation6], 0
          %s239 = sshll.u32 %s3, 4
          %s240 = int_to_ptr.hbm [resolvable:$true] %s239
          %s241 = sshll.u32 [#allocation7], 4
          %s242 = int_to_ptr.vmem [resolvable:$true] %s241
          %247 = dma.hbm_to_vmem [thread:$0]  %s240, 24576, %s242, [#allocation6], 192, 192, 12
        $region20: #{attn_module_forward.1} parent=11 // pred_fallthru
          _
        // Predicated region
        $region21: #{attn_module_forward.1} parent=11 // pred_check
          %p248 = pneg %p137
        $region22: #{attn_module_forward.1} parent=11 // pred_check_branch
          %250 = sbr.rel (%p248) target = $region24
        $region23: #{attn_module_forward.1} parent=11 // pred_region
          %252 = vsyncadd [#allocation9], 0
          %s253 = sshll.u32 %s4, 4
          %s254 = int_to_ptr.hbm [resolvable:$true] %s253
          %s255 = sshll.u32 [#allocation8], 4
          %s256 = int_to_ptr.vmem [resolvable:$true] %s255
          %261 = dma.hbm_to_vmem [thread:$0]  %s254, 8192, %s256, [#allocation9], 64, 64, 4
        $region24: #{attn_module_forward.1} parent=11 // pred_fallthru
          _
        // Predicated region
        $region25: #{attn_module_forward.1} parent=11 // pred_check
          %p262 = pneg %p158
        $region26: #{attn_module_forward.1} parent=11 // pred_check_branch
          %264 = sbr.rel (%p262) target = $region28
        $region27: #{attn_module_forward.1} parent=11 // pred_region
          %266 = vsyncadd [#allocation9], 0
          %s267 = sshll.u32 %s5, 4
          %s268 = int_to_ptr.hbm [resolvable:$true] %s267
          %s269 = sshll.u32 [#allocation10], 4
          %s270 = int_to_ptr.vmem [resolvable:$true] %s269
          %275 = dma.hbm_to_vmem [thread:$0]  %s268, 32768, %s270, [#allocation9], 256, 256, 16
        $region28: #{attn_module_forward.1} parent=11 // pred_fallthru
          _
        // Predicated region
        $region29: #{attn_module_forward.1} parent=11 // pred_check
          %p276 = pneg %p179
        $region30: #{attn_module_forward.1} parent=11 // pred_check_branch
          %278 = sbr.rel (%p276) target = $region32
        $region31: #{attn_module_forward.1} parent=11 // pred_region
          %280 = vsyncadd [#allocation12], 0
          %s281 = sshll.u32 %s6, 4
          %s282 = int_to_ptr.hbm [resolvable:$true] %s281
          %s283 = sshll.u32 [#allocation11], 4
          %s284 = int_to_ptr.vmem [resolvable:$true] %s283
          %289 = dma.hbm_to_vmem [thread:$0]  %s282, 32768, %s284, [#allocation12], 64, 64, 4
        $region32: #{attn_module_forward.1} parent=11 // pred_fallthru
          _
      $region12: #{attn_module_forward.1} parent=5 // pred_fallthru
        _
      %p290 = scmp.lt.s32.totalorder %s22, 2
      // Predicated region
      $region33: #{attn_module_forward.1} parent=5 // pred_check
        %p291 = pneg %p290
      $region34: #{attn_module_forward.1} parent=5 // pred_check_branch
        %293 = sbr.rel (%p291) target = $region36
      $region35: #{attn_module_forward.1} parent=5 // pred_region
        // Predicated region
        $region37: #{attn_module_forward.1} parent=35 // pred_check
          %p294 = pneg %p42
        $region38: #{attn_module_forward.1} parent=35 // pred_check_branch
          %296 = sbr.rel (%p294) target = $region40
        $region39: #{attn_module_forward.1} parent=35 // pred_region
          %s297 = sand.u32 %s32, 1
          %s298 = scalar_lea.sflag [#allocation3], %s297
          %s299 = sand.u32 %s32, 1
          %s300 = smul.addr %s299, 16
          %s301 = scalar_lea.vmem [#allocation2], %s300
          %303 = vsyncadd %s298, 0
          %s304 = smul.addr %s22, 2
          %s305 = smul.addr %s304, 8
          %s306 = scalar_lea.hbm %s0, %s305
          %s307 = sshll.u32 %s306, 4
          %s308 = int_to_ptr.hbm [resolvable:$true] %s307
          %s309 = sshll.u32 %s301, 4
          %s310 = int_to_ptr.vmem [resolvable:$true] %s309
          %315 = dma.hbm_to_vmem [thread:$0]  %s308, 256, %s310, %s298, 128, 128, 8
        $region40: #{attn_module_forward.1} parent=35 // pred_fallthru
          _
        // Predicated region
        $region41: #{attn_module_forward.1} parent=35 // pred_check
          %p316 = pneg %p68
        $region42: #{attn_module_forward.1} parent=35 // pred_check_branch
          %318 = sbr.rel (%p316) target = $region44
        $region43: #{attn_module_forward.1} parent=35 // pred_region
          %p319 = scmp.lt.s32.totalorder %s22, 1
          %s320 = scalar_select %p319, %s22, 1
          %s321 = scalar_lea.vmem %s1, %s320
        $region44: #{attn_module_forward.1} parent=35 // pred_fallthru
          _
      $region36: #{attn_module_forward.1} parent=5 // pred_fallthru
        _
      %p322 = scmp.le.s32.totalorder 1, %s22
      %p323 = scmp.lt.s32.totalorder %s22, 3
      %p324 = pnand %p322, %p323
      %p325 = pneg %p324
      // Predicated region
      $region45: #{attn_module_forward.1} parent=5 // pred_check
        _
      $region46: #{attn_module_forward.1} parent=5 // pred_check_branch
        %327 = sbr.rel (%p324) target = $region48
      $region47: #{attn_module_forward.1} parent=5 // pred_region
        %s328 = ssub.s32 %s22, 1
        %s329 = sand.u32 %s35, 1
        %s330 = scalar_lea.sflag [#allocation3], %s329
        %s331 = sand.u32 %s35, 1
        %s332 = smul.addr %s331, 16
        %s333 = scalar_lea.vmem [#allocation2], %s332
        // Predicated region
        $region49: #{attn_module_forward.1} parent=47 // pred_check
          %p334 = pneg %p48
        $region50: #{attn_module_forward.1} parent=47 // pred_check_branch
          %336 = sbr.rel (%p334) target = $region52
        $region51: #{attn_module_forward.1} parent=47 // pred_region
          %338 = dma.done %s330, 256
        $region52: #{attn_module_forward.1} parent=47 // pred_fallthru
          _
        // Predicated region
        $region53: #{attn_module_forward.1} parent=47 // pred_check
          %p339 = pneg %p95
        $region54: #{attn_module_forward.1} parent=47 // pred_check_branch
          %341 = sbr.rel (%p339) target = $region56
        $region55: #{attn_module_forward.1} parent=47 // pred_region
          %343 = dma.done [#allocation6], 4096
        $region56: #{attn_module_forward.1} parent=47 // pred_fallthru
          _
        // Predicated region
        $region57: #{attn_module_forward.1} parent=47 // pred_check
          %p344 = pneg %p116
        $region58: #{attn_module_forward.1} parent=47 // pred_check_branch
          %346 = sbr.rel (%p344) target = $region60
        $region59: #{attn_module_forward.1} parent=47 // pred_region
          %348 = dma.done [#allocation6], 24576
        $region60: #{attn_module_forward.1} parent=47 // pred_fallthru
          _
        // Predicated region
        $region61: #{attn_module_forward.1} parent=47 // pred_check
          %p349 = pneg %p137
        $region62: #{attn_module_forward.1} parent=47 // pred_check_branch
          %351 = sbr.rel (%p349) target = $region64
        $region63: #{attn_module_forward.1} parent=47 // pred_region
          %353 = dma.done [#allocation9], 8192
        $region64: #{attn_module_forward.1} parent=47 // pred_fallthru
          _
        // Predicated region
        $region65: #{attn_module_forward.1} parent=47 // pred_check
          %p354 = pneg %p158
        $region66: #{attn_module_forward.1} parent=47 // pred_check_branch
          %356 = sbr.rel (%p354) target = $region68
        $region67: #{attn_module_forward.1} parent=47 // pred_region
          %358 = dma.done [#allocation9], 32768
        $region68: #{attn_module_forward.1} parent=47 // pred_fallthru
          _
        // Predicated region
        $region69: #{attn_module_forward.1} parent=47 // pred_check
          %p359 = pneg %p179
        $region70: #{attn_module_forward.1} parent=47 // pred_check_branch
          %361 = sbr.rel (%p359) target = $region72
        $region71: #{attn_module_forward.1} parent=47 // pred_region
          %363 = dma.done [#allocation12], 32768
        $region72: #{attn_module_forward.1} parent=47 // pred_fallthru
          _
        %s364 = sand.u32 %s35, 1
        %s365 = scalar_lea.sflag [#allocation3], %s364
        %s366 = sand.u32 %s35, 1
        %s367 = smul.addr %s366, 16
        %s368 = scalar_lea.vmem [#allocation2], %s367
        %p369 = pneg %p48
        %p370 = pneg %p45
        %p371 = scmp.lt.s32.totalorder %s27, 1
        %s372 = scalar_select %p371, %s27, 1
        %s373 = scalar_lea.vmem %s1, %s372
        %p374 = pneg %p74
        %p375 = pneg %p71
        %p376 = pneg %p95
        %p377 = pneg %p92
        %p378 = pneg %p116
        %p379 = pneg %p113
        %p380 = pneg %p137
        %p381 = pneg %p134
        %p382 = pneg %p158
        %p383 = pneg %p155
        %p384 = pneg %p179
        %p385 = pneg %p176
        %p386 = pneg %p205
        %p387 = pneg %p202
        %s388 = sand.u32 %s192, 1
        %s389 = scalar_lea.sflag [#allocation4], %s388
        %s390 = sand.u32 %s192, 1
        %s391 = smul.addr %s390, 16
        %s392 = scalar_lea.vmem [#allocation13], %s391
        %p393 = scmp.lt.s32.totalorder %s27, 1
        %s394 = scalar_select %p393, %s27, 1
        %s395 = scalar_lea.vmem %s1, %s394
        %v397 = vld [vmem:[%s333] sm:$0xff]
        %v398 = vld [vmem:[%s333 + $0x8] sm:$0xff]
        %v399 = vld [vmem:[%s395] sm:$0x1]
        %v401 = vperm.slane %v399, 0
        %v403 = vadd.f32 %v397, %v401
        %v404 = vadd.f32 %v398, %v401
        loop: start=0, step=1, limit=8
        $region73: #{attn_module_forward.1} parent=47 // loop_pre_header
          _
        $region74: #{attn_module_forward.1} parent=47 // loop_header
          %s406 = sphi 0, %s410
          %p407 = scmp.ge.s32.totalorder %s406, 8
          %v411 = vphi %v403, %v2087
          %v412 = vphi %v404, %v2088
        $region75: #{attn_module_forward.1} parent=47 // loop_header_branch
          %409 = sbr.rel (%p407) target = $region79
        $region76: #{attn_module_forward.1} parent=47 // loop_body
          %s413 = smul.u32 %s406, 4
          %s414 = smul.addr %s413, 8
          %s415 = scalar_lea.vmem [#allocation5], %s414
          %v416 = vld [vmem:[%s415] sm:$0xff]
          %v417 = vld [vmem:[%s415 + $0x8] sm:$0xff]
          %v418 = vld [vmem:[%s415 + $0x10] sm:$0xff]
          %v419 = vld [vmem:[%s415 + $0x18] sm:$0xff]
          %420 = vadd.xlane.f32.xlu0 %v411
          %v421 = vpop.xlane.xlu0 %420
          %422 = vadd.xlane.f32.xlu0 %v412
          %v423 = vpop.xlane.xlu0 %422
          %v424 = vrcp.pop 128.0
          %v425 = vmul.f32 128.0, %v424
          %v426 = vsub.f32 1.0, %v425
          %v427 = vmul.f32 %v424, %v426
          %v428 = vadd.f32 %v424, %v427
          %vm429 = vweird.f32 %v424
          %v430 = vsel %vm429, %v424, %v428
          %v431 = vmul.f32 %v421, %v430
          %v432 = vmul.f32 %v423, %v430
          %v433 = vsub.f32 %v411, %v431
          %v434 = vsub.f32 %v412, %v432
          %v435 = vmul.f32 %v433, %v433
          %v436 = vmul.f32 %v434, %v434
          %437 = vadd.xlane.f32.xlu0 %v435
          %v438 = vpop.xlane.xlu0 %437
          %439 = vadd.xlane.f32.xlu0 %v436
          %v440 = vpop.xlane.xlu0 %439
          %v441 = vmul.f32 %v438, %v430
          %v442 = vmul.f32 %v440, %v430
          %v443 = vadd.f32 %v441, 1e-05
          %v444 = vadd.f32 %v442, 1e-05
          %v445 = vrsqrt.pop %v443
          %v446 = vmul.f32 %v445, %v443
          %v447 = vmul.f32 %v446, %v445
          %v448 = vmul.f32 0.5, %v447
          %v449 = vsub.f32 1.5, %v448
          %v450 = vmul.f32 %v445, %v449
          %vm451 = vweird.f32 %v443
          %vm452 = vweird.f32 %v445
          %vm453 = vmor %vm451, %vm452
          %v454 = vsel %vm453, %v445, %v450
          %v455 = vrsqrt.pop %v444
          %v456 = vmul.f32 %v455, %v444
          %v457 = vmul.f32 %v456, %v455
          %v458 = vmul.f32 0.5, %v457
          %v459 = vsub.f32 1.5, %v458
          %v460 = vmul.f32 %v455, %v459
          %vm461 = vweird.f32 %v444
          %vm462 = vweird.f32 %v455
          %vm463 = vmor %vm461, %vm462
          %v464 = vsel %vm463, %v455, %v460
          %v465 = vmul.f32 %v433, %v454
          %v466 = vmul.f32 %v434, %v464
          %v467 = vperm.slane %v416, 0
          %v468 = vmul.f32 %v465, %v467
          %v469 = vmul.f32 %v466, %v467
          %v470 = vperm.slane %v416, 1
          %v471 = vadd.f32 %v468, %v470
          %v472 = vadd.f32 %v469, %v470
          %v473 = vpack.c.bf16 %v472, %v471
          %s474 = smul.u32 %s406, 48
          %s475 = smul.addr %s474, 4
          %s476 = scalar_lea.vmem [#allocation7], %s475
          %v477 = vld [vmem:[%s476] sm:$0xff]
          %v478 = vld [vmem:[%s476 + $0x8] sm:$0xf]
          %v479 = vld [vmem:[%s476 + $0xc] sm:$0xff]
          %v480 = vld [vmem:[%s476 + $0x14] sm:$0xf]
          %v481 = vld [vmem:[%s476 + $0x18] sm:$0xff]
          %v482 = vld [vmem:[%s476 + $0x20] sm:$0xf]
          %v483 = vld [vmem:[%s476 + $0x24] sm:$0xff]
          %v484 = vld [vmem:[%s476 + $0x2c] sm:$0xf]
          %v485 = vld [vmem:[%s476 + $0x30] sm:$0xff]
          %v486 = vld [vmem:[%s476 + $0x38] sm:$0xf]
          %v487 = vld [vmem:[%s476 + $0x3c] sm:$0xff]
          %v488 = vld [vmem:[%s476 + $0x44] sm:$0xf]
          %v489 = vld [vmem:[%s476 + $0x48] sm:$0xff]
          %v490 = vld [vmem:[%s476 + $0x50] sm:$0xf]
          %v491 = vld [vmem:[%s476 + $0x54] sm:$0xff]
          %v492 = vld [vmem:[%s476 + $0x5c] sm:$0xf]
          %v493 = vld [vmem:[%s476 + $0x60] sm:$0xff]
          %v494 = vld [vmem:[%s476 + $0x68] sm:$0xf]
          %v495 = vld [vmem:[%s476 + $0x6c] sm:$0xff]
          %v496 = vld [vmem:[%s476 + $0x74] sm:$0xf]
          %v497 = vld [vmem:[%s476 + $0x78] sm:$0xff]
          %v498 = vld [vmem:[%s476 + $0x80] sm:$0xf]
          %v499 = vld [vmem:[%s476 + $0x84] sm:$0xff]
          %v500 = vld [vmem:[%s476 + $0x8c] sm:$0xf]
          %v501 = vld [vmem:[%s476 + $0x90] sm:$0xff]
          %v502 = vld [vmem:[%s476 + $0x98] sm:$0xf]
          %v503 = vld [vmem:[%s476 + $0x9c] sm:$0xff]
          %v504 = vld [vmem:[%s476 + $0xa4] sm:$0xf]
          %v505 = vld [vmem:[%s476 + $0xa8] sm:$0xff]
          %v506 = vld [vmem:[%s476 + $0xb0] sm:$0xf]
          %v507 = vld [vmem:[%s476 + $0xb4] sm:$0xff]
          %v508 = vld [vmem:[%s476 + $0xbc] sm:$0xf]
          %v509 = vperm.slane %v416, 4
          %v510 = vperm.slane %v417, 4
          %v511 = vperm.slane %v418, 4
          %v544 = vunpack.c.l.b16 %v477
          %v545 = vunpack.c.h.b16 %v477
          %v546 = vunpack.c.l.b16 %v478
          %v547 = vunpack.c.l.b16 %v479
          %v548 = vunpack.c.h.b16 %v479
          %v549 = vunpack.c.l.b16 %v480
          %v550 = vunpack.c.l.b16 %v481
          %v551 = vunpack.c.h.b16 %v481
          %v552 = vunpack.c.l.b16 %v482
          %v553 = vunpack.c.l.b16 %v483
          %v554 = vunpack.c.h.b16 %v483
          %v555 = vunpack.c.l.b16 %v484
          %v556 = vunpack.c.l.b16 %v485
          %v557 = vunpack.c.h.b16 %v485
          %v558 = vunpack.c.l.b16 %v486
          %v559 = vunpack.c.l.b16 %v487
          %v560 = vunpack.c.h.b16 %v487
          %v561 = vunpack.c.l.b16 %v488
          %v562 = vunpack.c.l.b16 %v489
          %v563 = vunpack.c.h.b16 %v489
          %v564 = vunpack.c.l.b16 %v490
          %v565 = vunpack.c.l.b16 %v491
          %v566 = vunpack.c.h.b16 %v491
          %v567 = vunpack.c.l.b16 %v492
          %v568 = vunpack.c.l.b16 %v493
          %v569 = vunpack.c.h.b16 %v493
          %v570 = vunpack.c.l.b16 %v494
          %v571 = vunpack.c.l.b16 %v495
          %v572 = vunpack.c.h.b16 %v495
          %v573 = vunpack.c.l.b16 %v496
          %v574 = vunpack.c.l.b16 %v497
          %v575 = vunpack.c.h.b16 %v497
          %v576 = vunpack.c.l.b16 %v498
          %v577 = vunpack.c.l.b16 %v499
          %v578 = vunpack.c.h.b16 %v499
          %v579 = vunpack.c.l.b16 %v500
          %v580 = vunpack.c.l.b16 %v501
          %v581 = vunpack.c.h.b16 %v501
          %v582 = vunpack.c.l.b16 %v502
          %v583 = vunpack.c.l.b16 %v503
          %v584 = vunpack.c.h.b16 %v503
          %v585 = vunpack.c.l.b16 %v504
          %v586 = vunpack.c.l.b16 %v505
          %v587 = vunpack.c.h.b16 %v505
          %v588 = vunpack.c.l.b16 %v506
          %v589 = vunpack.c.l.b16 %v507
          %v590 = vunpack.c.h.b16 %v507
          %v591 = vunpack.c.l.b16 %v508
          %v592 = vpack.c.b16 %v547, %v544
          %v593 = vpack.c.b16 %v548, %v545
          %v594 = vpack.c.b16 %v549, %v546
          %v595 = vpack.c.b16 %v553, %v550
          %v596 = vpack.c.b16 %v554, %v551
          %v597 = vpack.c.b16 %v555, %v552
          %v598 = vpack.c.b16 %v559, %v556
          %v599 = vpack.c.b16 %v560, %v557
          %v600 = vpack.c.b16 %v561, %v558
          %v601 = vpack.c.b16 %v565, %v562
          %v602 = vpack.c.b16 %v566, %v563
          %v603 = vpack.c.b16 %v567, %v564
          %v604 = vpack.c.b16 %v571, %v568
          %v605 = vpack.c.b16 %v572, %v569
          %v606 = vpack.c.b16 %v573, %v570
          %v607 = vpack.c.b16 %v577, %v574
          %v608 = vpack.c.b16 %v578, %v575
          %v609 = vpack.c.b16 %v579, %v576
          %v610 = vpack.c.b16 %v583, %v580
          %v611 = vpack.c.b16 %v584, %v581
          %v612 = vpack.c.b16 %v585, %v582
          %v613 = vpack.c.b16 %v589, %v586
          %v614 = vpack.c.b16 %v590, %v587
          %v615 = vpack.c.b16 %v591, %v588
          %640 = vmatpush.bf16.msra.mxu0 %v613
          %641 = vmatpush.bf16.msra.mxu0 %v610
          %642 = vmatpush.bf16.msra.mxu0 %v607
          %643 = vmatpush.bf16.msra.mxu0 %v604
          %644 = vmatpush.bf16.msra.mxu0 %v601
          %645 = vmatpush.bf16.msra.mxu0 %v598
          %646 = vmatpush.bf16.msra.mxu0 %v595
          %647 = vmatpush.bf16.msra.mxu0 %v592
          %648 = vmatmul.bf16.gmra.mxu0 %v473
          %v649 = vpop.f32.mrf.mxu0
          %v650 = vadd.f32 %v509, %v649
          %v651 = vpop.f32.mrf.mxu0
          %v652 = vadd.f32 %v509, %v651
          %653 = vdwg.mxu0
          %654 = vmatpush.bf16.msra.mxu0 %v614
          %655 = vmatpush.bf16.msra.mxu0 %v611
          %656 = vmatpush.bf16.msra.mxu0 %v608
          %657 = vmatpush.bf16.msra.mxu0 %v605
          %658 = vmatpush.bf16.msra.mxu0 %v602
          %659 = vmatpush.bf16.msra.mxu0 %v599
          %660 = vmatpush.bf16.msra.mxu0 %v596
          %661 = vmatpush.bf16.msra.mxu0 %v593
          %662 = vmatmul.bf16.gmra.mxu0 %v473
          %v663 = vpop.f32.mrf.mxu0
          %v664 = vadd.f32 %v510, %v663
          %v665 = vpop.f32.mrf.mxu0
          %v666 = vadd.f32 %v510, %v665
          %667 = vdwg.mxu0
          %668 = vmatpush.bf16.msra.mxu0 %v615
          %669 = vmatpush.bf16.msra.mxu0 %v612
          %670 = vmatpush.bf16.msra.mxu0 %v609
          %671 = vmatpush.bf16.msra.mxu0 %v606
          %672 = vmatpush.bf16.msra.mxu0 %v603
          %673 = vmatpush.bf16.msra.mxu0 %v600
          %674 = vmatpush.bf16.msra.mxu0 %v597
          %675 = vmatpush.bf16.msra.mxu0 %v594
          %676 = vmatmul.bf16.gmra.mxu0 %v473
          %v677 = vpop.f32.mrf.mxu0
          %v678 = vadd.f32 %v511, %v677
          %v679 = vpop.f32.mrf.mxu0
          %v680 = vadd.f32 %v511, %v679
          %681 = vdwg.mxu0
          %v682 = vpack.c.bf16 %v664, %v650
          %v683 = vpack.c.bf16 %v678, %v678
          %v684 = vpack.c.bf16 %v666, %v652
          %v685 = vpack.c.bf16 %v680, %v680
          %s686 = smul.u32 %s406, 16
          %s687 = smul.addr %s686, 4
          %s688 = scalar_lea.vmem [#allocation8], %s687
          %v689 = vld [vmem:[%s688] sm:$0xf]
          %v690 = vld [vmem:[%s688 + $0x4] sm:$0xf]
          %v691 = vld [vmem:[%s688 + $0x8] sm:$0xf]
          %v692 = vld [vmem:[%s688 + $0xc] sm:$0xf]
          %v693 = vld [vmem:[%s688 + $0x10] sm:$0xf]
          %v694 = vld [vmem:[%s688 + $0x14] sm:$0xf]
          %v695 = vld [vmem:[%s688 + $0x18] sm:$0xf]
          %v696 = vld [vmem:[%s688 + $0x1c] sm:$0xf]
          %v697 = vld [vmem:[%s688 + $0x20] sm:$0xf]
          %v698 = vld [vmem:[%s688 + $0x24] sm:$0xf]
          %v699 = vld [vmem:[%s688 + $0x28] sm:$0xf]
          %v700 = vld [vmem:[%s688 + $0x2c] sm:$0xf]
          %v701 = vld [vmem:[%s688 + $0x30] sm:$0xf]
          %v702 = vld [vmem:[%s688 + $0x34] sm:$0xf]
          %v703 = vld [vmem:[%s688 + $0x38] sm:$0xf]
          %v704 = vld [vmem:[%s688 + $0x3c] sm:$0xf]
          %v707 = vunpack.c.l.b16 %v682
          %v708 = vunpack.c.l.b16 %v684
          %v709 = vpack.c.b16 %v708, %v707
          %v710 = vunpack.c.h.b16 %v682
          %v711 = vunpack.c.h.b16 %v684
          %v712 = vpack.c.b16 %v711, %v710
          %vm713 = vcmask 130048
          %v715 = vsel %vm713, %v709, 0
          %v718 = vsel %vm713, %v712, 0
          %720 = vmatpush.bf16.xpose.msra.mxu0 0
          %721 = vmatpush.bf16.xpose.msra.mxu0 0
          %722 = vmatpush.bf16.xpose.msra.mxu0 0
          %723 = vmatpush.bf16.xpose.msra.mxu0 0
          %724 = vmatpush.bf16.xpose.msra.mxu0 0
          %725 = vmatpush.bf16.xpose.msra.mxu0 0
          %726 = vmatpush.bf16.xpose.msra.mxu0 0
          %727 = vmatpush.bf16.xpose.msra.mxu0 %v718
          %728 = vmatmul.bf16.gmra.mxu0 %v715
          %v729 = vpop.f32.mrf.mxu0
          %v730 = vadd.f32 0.0, %v729
          %v731 = vpop.f32.mrf.mxu0
          %v732 = vadd.f32 0.0, %v731
          %733 = vdwg.mxu0
          %v734 = vsel %vm713, %v730, -inf
          %735 = vmax.xlane.f32.xlu0 %v734
          %v736 = vpop.xlane.xlu0 %735
          %v737 = vsel %vm713, %v732, -inf
          %738 = vmax.xlane.f32.xlu0 %v737
          %v739 = vpop.xlane.xlu0 %738
          %v740 = vsub.f32 %v730, %v736
          %v741 = vsub.f32 %v732, %v739
          %v742 = vmul.f32 %v740, 1.442695
          %v743 = vpow.pop %v742
          %v744 = vmul.f32 %v741, 1.442695
          %v745 = vpow.pop %v744
          %v746 = vsel %vm713, %v743, 0.0
          %747 = vadd.xlane.f32.xlu0 %v746
          %v748 = vpop.xlane.xlu0 %747
          %v749 = vsel %vm713, %v745, 0.0
          %750 = vadd.xlane.f32.xlu0 %v749
          %v751 = vpop.xlane.xlu0 %750
          %v752 = vrcp.pop %v748
          %v753 = vrcp.pop %v751
          %v754 = vmul.f32 %v743, %v752
          %v755 = vmul.f32 %v745, %v753
          %v756 = vpack.c.bf16 %v755, %v754
          %v759 = vunpack.c.l.b16 %v683
          %v760 = vunpack.c.l.b16 %v685
          %v761 = vpack.c.b16 %v760, %v759
          %v764 = vsel %vm713, %v756, 0
          %766 = vmatpush.bf16.msra.mxu0 0
          %767 = vmatpush.bf16.msra.mxu0 0
          %768 = vmatpush.bf16.msra.mxu0 0
          %769 = vmatpush.bf16.msra.mxu0 0
          %770 = vmatpush.bf16.msra.mxu0 0
          %771 = vmatpush.bf16.msra.mxu0 0
          %772 = vmatpush.bf16.msra.mxu0 0
          %773 = vmatpush.bf16.msra.mxu0 %v761
          %774 = vmatmul.bf16.gmra.mxu0 %v764
          %v775 = vpop.f32.mrf.mxu0
          %v776 = vadd.f32 0.0, %v775
          %v777 = vpop.f32.mrf.mxu0
          %v778 = vadd.f32 0.0, %v777
          %779 = vdwg.mxu0
          %v780 = vpack.c.bf16 %v778, %v776
          %781 = vrot.lane.b32.xlu0 %v709, 112
          %v782 = vpop.permute.xlu0 %781
          %783 = vrot.lane.b32.xlu0 %v712, 112
          %v784 = vpop.permute.xlu0 %783
          %v786 = vsel %vm713, %v782, 0
          %v789 = vsel %vm713, %v784, 0
          %791 = vmatpush.bf16.xpose.msra.mxu0 0
          %792 = vmatpush.bf16.xpose.msra.mxu0 0
          %793 = vmatpush.bf16.xpose.msra.mxu0 0
          %794 = vmatpush.bf16.xpose.msra.mxu0 0
          %795 = vmatpush.bf16.xpose.msra.mxu0 0
          %796 = vmatpush.bf16.xpose.msra.mxu0 0
          %797 = vmatpush.bf16.xpose.msra.mxu0 0
          %798 = vmatpush.bf16.xpose.msra.mxu0 %v789
          %799 = vmatmul.bf16.gmra.mxu0 %v786
          %v800 = vpop.f32.mrf.mxu0
          %v801 = vadd.f32 0.0, %v800
          %v802 = vpop.f32.mrf.mxu0
          %v803 = vadd.f32 0.0, %v802
          %804 = vdwg.mxu0
          %v805 = vsel %vm713, %v801, -inf
          %806 = vmax.xlane.f32.xlu0 %v805
          %v807 = vpop.xlane.xlu0 %806
          %v808 = vsel %vm713, %v803, -inf
          %809 = vmax.xlane.f32.xlu0 %v808
          %v810 = vpop.xlane.xlu0 %809
          %v811 = vsub.f32 %v801, %v807
          %v812 = vsub.f32 %v803, %v810
          %v813 = vmul.f32 %v811, 1.442695
          %v814 = vpow.pop %v813
          %v815 = vmul.f32 %v812, 1.442695
          %v816 = vpow.pop %v815
          %v817 = vsel %vm713, %v814, 0.0
          %818 = vadd.xlane.f32.xlu0 %v817
          %v819 = vpop.xlane.xlu0 %818
          %v820 = vsel %vm713, %v816, 0.0
          %821 = vadd.xlane.f32.xlu0 %v820
          %v822 = vpop.xlane.xlu0 %821
          %v823 = vrcp.pop %v819
          %v824 = vrcp.pop %v822
          %v825 = vmul.f32 %v814, %v823
          %v826 = vmul.f32 %v816, %v824
          %v827 = vpack.c.bf16 %v826, %v825
          %828 = vrot.lane.b32.xlu0 %v761, 112
          %v829 = vpop.permute.xlu0 %828
          %v832 = vsel %vm713, %v827, 0
          %834 = vmatpush.bf16.msra.mxu0 0
          %835 = vmatpush.bf16.msra.mxu0 0
          %836 = vmatpush.bf16.msra.mxu0 0
          %837 = vmatpush.bf16.msra.mxu0 0
          %838 = vmatpush.bf16.msra.mxu0 0
          %839 = vmatpush.bf16.msra.mxu0 0
          %840 = vmatpush.bf16.msra.mxu0 0
          %841 = vmatpush.bf16.msra.mxu0 %v829
          %842 = vmatmul.bf16.gmra.mxu0 %v832
          %v843 = vpop.f32.mrf.mxu0
          %v844 = vadd.f32 0.0, %v843
          %v845 = vpop.f32.mrf.mxu0
          %v846 = vadd.f32 0.0, %v845
          %847 = vdwg.mxu0
          %v848 = vpack.c.bf16 %v846, %v844
          %v851 = vunpack.c.l.b16 %v691
          %v852 = vunpack.c.l.b16 %v692
          %v853 = vpack.c.b16 %v852, %v851
          %v856 = vsel %vm713, %v848, 0
          %858 = vmatpush.bf16.msra.mxu0 0
          %859 = vmatpush.bf16.msra.mxu0 0
          %860 = vmatpush.bf16.msra.mxu0 0
          %861 = vmatpush.bf16.msra.mxu0 0
          %862 = vmatpush.bf16.msra.mxu0 0
          %863 = vmatpush.bf16.msra.mxu0 0
          %864 = vmatpush.bf16.msra.mxu0 0
          %865 = vmatpush.bf16.msra.mxu0 %v853
          %866 = vmatmul.bf16.gmra.mxu0 %v856
          %v867 = vpop.f32.mrf.mxu0
          %v868 = vadd.f32 0.0, %v867
          %v869 = vpop.f32.mrf.mxu0
          %v870 = vadd.f32 0.0, %v869
          %871 = vdwg.mxu0
          %v874 = vunpack.c.l.b16 %v689
          %v875 = vunpack.c.l.b16 %v690
          %v876 = vpack.c.b16 %v875, %v874
          %v879 = vsel %vm713, %v780, 0
          %881 = vmatpush.bf16.msra.mxu0 0
          %882 = vmatpush.bf16.msra.mxu0 0
          %883 = vmatpush.bf16.msra.mxu0 0
          %884 = vmatpush.bf16.msra.mxu0 0
          %885 = vmatpush.bf16.msra.mxu0 0
          %886 = vmatpush.bf16.msra.mxu0 0
          %887 = vmatpush.bf16.msra.mxu0 0
          %888 = vmatpush.bf16.msra.mxu0 %v876
          %889 = vmatmul.bf16.gmra.mxu0 %v879
          %v890 = vpop.f32.mrf.mxu0
          %v891 = vadd.f32 %v868, %v890
          %v892 = vpop.f32.mrf.mxu0
          %v893 = vadd.f32 %v870, %v892
          %894 = vdwg.mxu0
          %895 = vrot.lane.b32.xlu0 %v709, 96
          %v896 = vpop.permute.xlu0 %895
          %897 = vrot.lane.b32.xlu0 %v712, 96
          %v898 = vpop.permute.xlu0 %897
          %v900 = vsel %vm713, %v896, 0
          %v903 = vsel %vm713, %v898, 0
          %905 = vmatpush.bf16.xpose.msra.mxu0 0
          %906 = vmatpush.bf16.xpose.msra.mxu0 0
          %907 = vmatpush.bf16.xpose.msra.mxu0 0
          %908 = vmatpush.bf16.xpose.msra.mxu0 0
          %909 = vmatpush.bf16.xpose.msra.mxu0 0
          %910 = vmatpush.bf16.xpose.msra.mxu0 0
          %911 = vmatpush.bf16.xpose.msra.mxu0 0
          %912 = vmatpush.bf16.xpose.msra.mxu0 %v903
          %913 = vmatmul.bf16.gmra.mxu0 %v900
          %v914 = vpop.f32.mrf.mxu0
          %v915 = vadd.f32 0.0, %v914
          %v916 = vpop.f32.mrf.mxu0
          %v917 = vadd.f32 0.0, %v916
          %918 = vdwg.mxu0
          %v919 = vsel %vm713, %v915, -inf
          %920 = vmax.xlane.f32.xlu0 %v919
          %v921 = vpop.xlane.xlu0 %920
          %v922 = vsel %vm713, %v917, -inf
          %923 = vmax.xlane.f32.xlu0 %v922
          %v924 = vpop.xlane.xlu0 %923
          %v925 = vsub.f32 %v915, %v921
          %v926 = vsub.f32 %v917, %v924
          %v927 = vmul.f32 %v925, 1.442695
          %v928 = vpow.pop %v927
          %v929 = vmul.f32 %v926, 1.442695
          %v930 = vpow.pop %v929
          %v931 = vsel %vm713, %v928, 0.0
          %932 = vadd.xlane.f32.xlu0 %v931
          %v933 = vpop.xlane.xlu0 %932
          %v934 = vsel %vm713, %v930, 0.0
          %935 = vadd.xlane.f32.xlu0 %v934
          %v936 = vpop.xlane.xlu0 %935
          %v937 = vrcp.pop %v933
          %v938 = vrcp.pop %v936
          %v939 = vmul.f32 %v928, %v937
          %v940 = vmul.f32 %v930, %v938
          %v941 = vpack.c.bf16 %v940, %v939
          %942 = vrot.lane.b32.xlu0 %v761, 96
          %v943 = vpop.permute.xlu0 %942
          %v946 = vsel %vm713, %v941, 0
          %948 = vmatpush.bf16.msra.mxu0 0
          %949 = vmatpush.bf16.msra.mxu0 0
          %950 = vmatpush.bf16.msra.mxu0 0
          %951 = vmatpush.bf16.msra.mxu0 0
          %952 = vmatpush.bf16.msra.mxu0 0
          %953 = vmatpush.bf16.msra.mxu0 0
          %954 = vmatpush.bf16.msra.mxu0 0
          %955 = vmatpush.bf16.msra.mxu0 %v943
          %956 = vmatmul.bf16.gmra.mxu0 %v946
          %v957 = vpop.f32.mrf.mxu0
          %v958 = vadd.f32 0.0, %v957
          %v959 = vpop.f32.mrf.mxu0
          %v960 = vadd.f32 0.0, %v959
          %961 = vdwg.mxu0
          %v962 = vpack.c.bf16 %v960, %v958
          %v965 = vunpack.c.l.b16 %v693
          %v966 = vunpack.c.l.b16 %v694
          %v967 = vpack.c.b16 %v966, %v965
          %v970 = vsel %vm713, %v962, 0
          %972 = vmatpush.bf16.msra.mxu0 0
          %973 = vmatpush.bf16.msra.mxu0 0
          %974 = vmatpush.bf16.msra.mxu0 0
          %975 = vmatpush.bf16.msra.mxu0 0
          %976 = vmatpush.bf16.msra.mxu0 0
          %977 = vmatpush.bf16.msra.mxu0 0
          %978 = vmatpush.bf16.msra.mxu0 0
          %979 = vmatpush.bf16.msra.mxu0 %v967
          %980 = vmatmul.bf16.gmra.mxu0 %v970
          %v981 = vpop.f32.mrf.mxu0
          %v982 = vadd.f32 0.0, %v981
          %v983 = vpop.f32.mrf.mxu0
          %v984 = vadd.f32 0.0, %v983
          %985 = vdwg.mxu0
          %v986 = vadd.f32 %v891, %v982
          %v987 = vadd.f32 %v893, %v984
          %988 = vrot.lane.b32.xlu0 %v709, 80
          %v989 = vpop.permute.xlu0 %988
          %990 = vrot.lane.b32.xlu0 %v712, 80
          %v991 = vpop.permute.xlu0 %990
          %v993 = vsel %vm713, %v989, 0
          %v996 = vsel %vm713, %v991, 0
          %998 = vmatpush.bf16.xpose.msra.mxu0 0
          %999 = vmatpush.bf16.xpose.msra.mxu0 0
          %1000 = vmatpush.bf16.xpose.msra.mxu0 0
          %1001 = vmatpush.bf16.xpose.msra.mxu0 0
          %1002 = vmatpush.bf16.xpose.msra.mxu0 0
          %1003 = vmatpush.bf16.xpose.msra.mxu0 0
          %1004 = vmatpush.bf16.xpose.msra.mxu0 0
          %1005 = vmatpush.bf16.xpose.msra.mxu0 %v996
          %1006 = vmatmul.bf16.gmra.mxu0 %v993
          %v1007 = vpop.f32.mrf.mxu0
          %v1008 = vadd.f32 0.0, %v1007
          %v1009 = vpop.f32.mrf.mxu0
          %v1010 = vadd.f32 0.0, %v1009
          %1011 = vdwg.mxu0
          %v1012 = vsel %vm713, %v1008, -inf
          %1013 = vmax.xlane.f32.xlu0 %v1012
          %v1014 = vpop.xlane.xlu0 %1013
          %v1015 = vsel %vm713, %v1010, -inf
          %1016 = vmax.xlane.f32.xlu0 %v1015
          %v1017 = vpop.xlane.xlu0 %1016
          %v1018 = vsub.f32 %v1008, %v1014
          %v1019 = vsub.f32 %v1010, %v1017
          %v1020 = vmul.f32 %v1018, 1.442695
          %v1021 = vpow.pop %v1020
          %v1022 = vmul.f32 %v1019, 1.442695
          %v1023 = vpow.pop %v1022
          %v1024 = vsel %vm713, %v1021, 0.0
          %1025 = vadd.xlane.f32.xlu0 %v1024
          %v1026 = vpop.xlane.xlu0 %1025
          %v1027 = vsel %vm713, %v1023, 0.0
          %1028 = vadd.xlane.f32.xlu0 %v1027
          %v1029 = vpop.xlane.xlu0 %1028
          %v1030 = vrcp.pop %v1026
          %v1031 = vrcp.pop %v1029
          %v1032 = vmul.f32 %v1021, %v1030
          %v1033 = vmul.f32 %v1023, %v1031
          %v1034 = vpack.c.bf16 %v1033, %v1032
          %1035 = vrot.lane.b32.xlu0 %v761, 80
          %v1036 = vpop.permute.xlu0 %1035
          %v1039 = vsel %vm713, %v1034, 0
          %1041 = vmatpush.bf16.msra.mxu0 0
          %1042 = vmatpush.bf16.msra.mxu0 0
          %1043 = vmatpush.bf16.msra.mxu0 0
          %1044 = vmatpush.bf16.msra.mxu0 0
          %1045 = vmatpush.bf16.msra.mxu0 0
          %1046 = vmatpush.bf16.msra.mxu0 0
          %1047 = vmatpush.bf16.msra.mxu0 0
          %1048 = vmatpush.bf16.msra.mxu0 %v1036
          %1049 = vmatmul.bf16.gmra.mxu0 %v1039
          %v1050 = vpop.f32.mrf.mxu0
          %v1051 = vadd.f32 0.0, %v1050
          %v1052 = vpop.f32.mrf.mxu0
          %v1053 = vadd.f32 0.0, %v1052
          %1054 = vdwg.mxu0
          %v1055 = vpack.c.bf16 %v1053, %v1051
          %v1058 = vunpack.c.l.b16 %v695
          %v1059 = vunpack.c.l.b16 %v696
          %v1060 = vpack.c.b16 %v1059, %v1058
          %v1063 = vsel %vm713, %v1055, 0
          %1065 = vmatpush.bf16.msra.mxu0 0
          %1066 = vmatpush.bf16.msra.mxu0 0
          %1067 = vmatpush.bf16.msra.mxu0 0
          %1068 = vmatpush.bf16.msra.mxu0 0
          %1069 = vmatpush.bf16.msra.mxu0 0
          %1070 = vmatpush.bf16.msra.mxu0 0
          %1071 = vmatpush.bf16.msra.mxu0 0
          %1072 = vmatpush.bf16.msra.mxu0 %v1060
          %1073 = vmatmul.bf16.gmra.mxu0 %v1063
          %v1074 = vpop.f32.mrf.mxu0
          %v1075 = vadd.f32 0.0, %v1074
          %v1076 = vpop.f32.mrf.mxu0
          %v1077 = vadd.f32 0.0, %v1076
          %1078 = vdwg.mxu0
          %v1079 = vadd.f32 %v986, %v1075
          %v1080 = vadd.f32 %v987, %v1077
          %1081 = vrot.lane.b32.xlu0 %v709, 64
          %v1082 = vpop.permute.xlu0 %1081
          %1083 = vrot.lane.b32.xlu0 %v712, 64
          %v1084 = vpop.permute.xlu0 %1083
          %v1086 = vsel %vm713, %v1082, 0
          %v1089 = vsel %vm713, %v1084, 0
          %1091 = vmatpush.bf16.xpose.msra.mxu0 0
          %1092 = vmatpush.bf16.xpose.msra.mxu0 0
          %1093 = vmatpush.bf16.xpose.msra.mxu0 0
          %1094 = vmatpush.bf16.xpose.msra.mxu0 0
          %1095 = vmatpush.bf16.xpose.msra.mxu0 0
          %1096 = vmatpush.bf16.xpose.msra.mxu0 0
          %1097 = vmatpush.bf16.xpose.msra.mxu0 0
          %1098 = vmatpush.bf16.xpose.msra.mxu0 %v1089
          %1099 = vmatmul.bf16.gmra.mxu0 %v1086
          %v1100 = vpop.f32.mrf.mxu0
          %v1101 = vadd.f32 0.0, %v1100
          %v1102 = vpop.f32.mrf.mxu0
          %v1103 = vadd.f32 0.0, %v1102
          %1104 = vdwg.mxu0
          %v1105 = vsel %vm713, %v1101, -inf
          %1106 = vmax.xlane.f32.xlu0 %v1105
          %v1107 = vpop.xlane.xlu0 %1106
          %v1108 = vsel %vm713, %v1103, -inf
          %1109 = vmax.xlane.f32.xlu0 %v1108
          %v1110 = vpop.xlane.xlu0 %1109
          %v1111 = vsub.f32 %v1101, %v1107
          %v1112 = vsub.f32 %v1103, %v1110
          %v1113 = vmul.f32 %v1111, 1.442695
          %v1114 = vpow.pop %v1113
          %v1115 = vmul.f32 %v1112, 1.442695
          %v1116 = vpow.pop %v1115
          %v1117 = vsel %vm713, %v1114, 0.0
          %1118 = vadd.xlane.f32.xlu0 %v1117
          %v1119 = vpop.xlane.xlu0 %1118
          %v1120 = vsel %vm713, %v1116, 0.0
          %1121 = vadd.xlane.f32.xlu0 %v1120
          %v1122 = vpop.xlane.xlu0 %1121
          %v1123 = vrcp.pop %v1119
          %v1124 = vrcp.pop %v1122
          %v1125 = vmul.f32 %v1114, %v1123
          %v1126 = vmul.f32 %v1116, %v1124
          %v1127 = vpack.c.bf16 %v1126, %v1125
          %1128 = vrot.lane.b32.xlu0 %v761, 64
          %v1129 = vpop.permute.xlu0 %1128
          %v1132 = vsel %vm713, %v1127, 0
          %1134 = vmatpush.bf16.msra.mxu0 0
          %1135 = vmatpush.bf16.msra.mxu0 0
          %1136 = vmatpush.bf16.msra.mxu0 0
          %1137 = vmatpush.bf16.msra.mxu0 0
          %1138 = vmatpush.bf16.msra.mxu0 0
          %1139 = vmatpush.bf16.msra.mxu0 0
          %1140 = vmatpush.bf16.msra.mxu0 0
          %1141 = vmatpush.bf16.msra.mxu0 %v1129
          %1142 = vmatmul.bf16.gmra.mxu0 %v1132
          %v1143 = vpop.f32.mrf.mxu0
          %v1144 = vadd.f32 0.0, %v1143
          %v1145 = vpop.f32.mrf.mxu0
          %v1146 = vadd.f32 0.0, %v1145
          %1147 = vdwg.mxu0
          %v1148 = vpack.c.bf16 %v1146, %v1144
          %v1151 = vunpack.c.l.b16 %v697
          %v1152 = vunpack.c.l.b16 %v698
          %v1153 = vpack.c.b16 %v1152, %v1151
          %v1156 = vsel %vm713, %v1148, 0
          %1158 = vmatpush.bf16.msra.mxu0 0
          %1159 = vmatpush.bf16.msra.mxu0 0
          %1160 = vmatpush.bf16.msra.mxu0 0
          %1161 = vmatpush.bf16.msra.mxu0 0
          %1162 = vmatpush.bf16.msra.mxu0 0
          %1163 = vmatpush.bf16.msra.mxu0 0
          %1164 = vmatpush.bf16.msra.mxu0 0
          %1165 = vmatpush.bf16.msra.mxu0 %v1153
          %1166 = vmatmul.bf16.gmra.mxu0 %v1156
          %v1167 = vpop.f32.mrf.mxu0
          %v1168 = vadd.f32 0.0, %v1167
          %v1169 = vpop.f32.mrf.mxu0
          %v1170 = vadd.f32 0.0, %v1169
          %1171 = vdwg.mxu0
          %v1172 = vadd.f32 %v1079, %v1168
          %v1173 = vadd.f32 %v1080, %v1170
          %1174 = vrot.lane.b32.xlu0 %v709, 48
          %v1175 = vpop.permute.xlu0 %1174
          %1176 = vrot.lane.b32.xlu0 %v712, 48
          %v1177 = vpop.permute.xlu0 %1176
          %v1179 = vsel %vm713, %v1175, 0
          %v1182 = vsel %vm713, %v1177, 0
          %1184 = vmatpush.bf16.xpose.msra.mxu0 0
          %1185 = vmatpush.bf16.xpose.msra.mxu0 0
          %1186 = vmatpush.bf16.xpose.msra.mxu0 0
          %1187 = vmatpush.bf16.xpose.msra.mxu0 0
          %1188 = vmatpush.bf16.xpose.msra.mxu0 0
          %1189 = vmatpush.bf16.xpose.msra.mxu0 0
          %1190 = vmatpush.bf16.xpose.msra.mxu0 0
          %1191 = vmatpush.bf16.xpose.msra.mxu0 %v1182
          %1192 = vmatmul.bf16.gmra.mxu0 %v1179
          %v1193 = vpop.f32.mrf.mxu0
          %v1194 = vadd.f32 0.0, %v1193
          %v1195 = vpop.f32.mrf.mxu0
          %v1196 = vadd.f32 0.0, %v1195
          %1197 = vdwg.mxu0
          %v1198 = vsel %vm713, %v1194, -inf
          %1199 = vmax.xlane.f32.xlu0 %v1198
          %v1200 = vpop.xlane.xlu0 %1199
          %v1201 = vsel %vm713, %v1196, -inf
          %1202 = vmax.xlane.f32.xlu0 %v1201
          %v1203 = vpop.xlane.xlu0 %1202
          %v1204 = vsub.f32 %v1194, %v1200
          %v1205 = vsub.f32 %v1196, %v1203
          %v1206 = vmul.f32 %v1204, 1.442695
          %v1207 = vpow.pop %v1206
          %v1208 = vmul.f32 %v1205, 1.442695
          %v1209 = vpow.pop %v1208
          %v1210 = vsel %vm713, %v1207, 0.0
          %1211 = vadd.xlane.f32.xlu0 %v1210
          %v1212 = vpop.xlane.xlu0 %1211
          %v1213 = vsel %vm713, %v1209, 0.0
          %1214 = vadd.xlane.f32.xlu0 %v1213
          %v1215 = vpop.xlane.xlu0 %1214
          %v1216 = vrcp.pop %v1212
          %v1217 = vrcp.pop %v1215
          %v1218 = vmul.f32 %v1207, %v1216
          %v1219 = vmul.f32 %v1209, %v1217
          %v1220 = vpack.c.bf16 %v1219, %v1218
          %1221 = vrot.lane.b32.xlu0 %v761, 48
          %v1222 = vpop.permute.xlu0 %1221
          %v1225 = vsel %vm713, %v1220, 0
          %1227 = vmatpush.bf16.msra.mxu0 0
          %1228 = vmatpush.bf16.msra.mxu0 0
          %1229 = vmatpush.bf16.msra.mxu0 0
          %1230 = vmatpush.bf16.msra.mxu0 0
          %1231 = vmatpush.bf16.msra.mxu0 0
          %1232 = vmatpush.bf16.msra.mxu0 0
          %1233 = vmatpush.bf16.msra.mxu0 0
          %1234 = vmatpush.bf16.msra.mxu0 %v1222
          %1235 = vmatmul.bf16.gmra.mxu0 %v1225
          %v1236 = vpop.f32.mrf.mxu0
          %v1237 = vadd.f32 0.0, %v1236
          %v1238 = vpop.f32.mrf.mxu0
          %v1239 = vadd.f32 0.0, %v1238
          %1240 = vdwg.mxu0
          %v1241 = vpack.c.bf16 %v1239, %v1237
          %v1244 = vunpack.c.l.b16 %v699
          %v1245 = vunpack.c.l.b16 %v700
          %v1246 = vpack.c.b16 %v1245, %v1244
          %v1249 = vsel %vm713, %v1241, 0
          %1251 = vmatpush.bf16.msra.mxu0 0
          %1252 = vmatpush.bf16.msra.mxu0 0
          %1253 = vmatpush.bf16.msra.mxu0 0
          %1254 = vmatpush.bf16.msra.mxu0 0
          %1255 = vmatpush.bf16.msra.mxu0 0
          %1256 = vmatpush.bf16.msra.mxu0 0
          %1257 = vmatpush.bf16.msra.mxu0 0
          %1258 = vmatpush.bf16.msra.mxu0 %v1246
          %1259 = vmatmul.bf16.gmra.mxu0 %v1249
          %v1260 = vpop.f32.mrf.mxu0
          %v1261 = vadd.f32 0.0, %v1260
          %v1262 = vpop.f32.mrf.mxu0
          %v1263 = vadd.f32 0.0, %v1262
          %1264 = vdwg.mxu0
          %v1265 = vadd.f32 %v1172, %v1261
          %v1266 = vadd.f32 %v1173, %v1263
          %1267 = vrot.lane.b32.xlu0 %v709, 32
          %v1268 = vpop.permute.xlu0 %1267
          %1269 = vrot.lane.b32.xlu0 %v712, 32
          %v1270 = vpop.permute.xlu0 %1269
          %v1272 = vsel %vm713, %v1268, 0
          %v1275 = vsel %vm713, %v1270, 0
          %1277 = vmatpush.bf16.xpose.msra.mxu0 0
          %1278 = vmatpush.bf16.xpose.msra.mxu0 0
          %1279 = vmatpush.bf16.xpose.msra.mxu0 0
          %1280 = vmatpush.bf16.xpose.msra.mxu0 0
          %1281 = vmatpush.bf16.xpose.msra.mxu0 0
          %1282 = vmatpush.bf16.xpose.msra.mxu0 0
          %1283 = vmatpush.bf16.xpose.msra.mxu0 0
          %1284 = vmatpush.bf16.xpose.msra.mxu0 %v1275
          %1285 = vmatmul.bf16.gmra.mxu0 %v1272
          %v1286 = vpop.f32.mrf.mxu0
          %v1287 = vadd.f32 0.0, %v1286
          %v1288 = vpop.f32.mrf.mxu0
          %v1289 = vadd.f32 0.0, %v1288
          %1290 = vdwg.mxu0
          %v1291 = vsel %vm713, %v1287, -inf
          %1292 = vmax.xlane.f32.xlu0 %v1291
          %v1293 = vpop.xlane.xlu0 %1292
          %v1294 = vsel %vm713, %v1289, -inf
          %1295 = vmax.xlane.f32.xlu0 %v1294
          %v1296 = vpop.xlane.xlu0 %1295
          %v1297 = vsub.f32 %v1287, %v1293
          %v1298 = vsub.f32 %v1289, %v1296
          %v1299 = vmul.f32 %v1297, 1.442695
          %v1300 = vpow.pop %v1299
          %v1301 = vmul.f32 %v1298, 1.442695
          %v1302 = vpow.pop %v1301
          %v1303 = vsel %vm713, %v1300, 0.0
          %1304 = vadd.xlane.f32.xlu0 %v1303
          %v1305 = vpop.xlane.xlu0 %1304
          %v1306 = vsel %vm713, %v1302, 0.0
          %1307 = vadd.xlane.f32.xlu0 %v1306
          %v1308 = vpop.xlane.xlu0 %1307
          %v1309 = vrcp.pop %v1305
          %v1310 = vrcp.pop %v1308
          %v1311 = vmul.f32 %v1300, %v1309
          %v1312 = vmul.f32 %v1302, %v1310
          %v1313 = vpack.c.bf16 %v1312, %v1311
          %1314 = vrot.lane.b32.xlu0 %v761, 32
          %v1315 = vpop.permute.xlu0 %1314
          %v1318 = vsel %vm713, %v1313, 0
          %1320 = vmatpush.bf16.msra.mxu0 0
          %1321 = vmatpush.bf16.msra.mxu0 0
          %1322 = vmatpush.bf16.msra.mxu0 0
          %1323 = vmatpush.bf16.msra.mxu0 0
          %1324 = vmatpush.bf16.msra.mxu0 0
          %1325 = vmatpush.bf16.msra.mxu0 0
          %1326 = vmatpush.bf16.msra.mxu0 0
          %1327 = vmatpush.bf16.msra.mxu0 %v1315
          %1328 = vmatmul.bf16.gmra.mxu0 %v1318
          %v1329 = vpop.f32.mrf.mxu0
          %v1330 = vadd.f32 0.0, %v1329
          %v1331 = vpop.f32.mrf.mxu0
          %v1332 = vadd.f32 0.0, %v1331
          %1333 = vdwg.mxu0
          %v1334 = vpack.c.bf16 %v1332, %v1330
          %v1337 = vunpack.c.l.b16 %v701
          %v1338 = vunpack.c.l.b16 %v702
          %v1339 = vpack.c.b16 %v1338, %v1337
          %v1342 = vsel %vm713, %v1334, 0
          %1344 = vmatpush.bf16.msra.mxu0 0
          %1345 = vmatpush.bf16.msra.mxu0 0
          %1346 = vmatpush.bf16.msra.mxu0 0
          %1347 = vmatpush.bf16.msra.mxu0 0
          %1348 = vmatpush.bf16.msra.mxu0 0
          %1349 = vmatpush.bf16.msra.mxu0 0
          %1350 = vmatpush.bf16.msra.mxu0 0
          %1351 = vmatpush.bf16.msra.mxu0 %v1339
          %1352 = vmatmul.bf16.gmra.mxu0 %v1342
          %v1353 = vpop.f32.mrf.mxu0
          %v1354 = vadd.f32 0.0, %v1353
          %v1355 = vpop.f32.mrf.mxu0
          %v1356 = vadd.f32 0.0, %v1355
          %1357 = vdwg.mxu0
          %v1358 = vadd.f32 %v1265, %v1354
          %v1359 = vadd.f32 %v1266, %v1356
          %1360 = vrot.lane.b32.xlu0 %v709, 16
          %v1361 = vpop.permute.xlu0 %1360
          %1362 = vrot.lane.b32.xlu0 %v712, 16
          %v1363 = vpop.permute.xlu0 %1362
          %v1365 = vsel %vm713, %v1361, 0
          %v1368 = vsel %vm713, %v1363, 0
          %1370 = vmatpush.bf16.xpose.msra.mxu0 0
          %1371 = vmatpush.bf16.xpose.msra.mxu0 0
          %1372 = vmatpush.bf16.xpose.msra.mxu0 0
          %1373 = vmatpush.bf16.xpose.msra.mxu0 0
          %1374 = vmatpush.bf16.xpose.msra.mxu0 0
          %1375 = vmatpush.bf16.xpose.msra.mxu0 0
          %1376 = vmatpush.bf16.xpose.msra.mxu0 0
          %1377 = vmatpush.bf16.xpose.msra.mxu0 %v1368
          %1378 = vmatmul.bf16.gmra.mxu0 %v1365
          %v1379 = vpop.f32.mrf.mxu0
          %v1380 = vadd.f32 0.0, %v1379
          %v1381 = vpop.f32.mrf.mxu0
          %v1382 = vadd.f32 0.0, %v1381
          %1383 = vdwg.mxu0
          %v1384 = vsel %vm713, %v1380, -inf
          %1385 = vmax.xlane.f32.xlu0 %v1384
          %v1386 = vpop.xlane.xlu0 %1385
          %v1387 = vsel %vm713, %v1382, -inf
          %1388 = vmax.xlane.f32.xlu0 %v1387
          %v1389 = vpop.xlane.xlu0 %1388
          %v1390 = vsub.f32 %v1380, %v1386
          %v1391 = vsub.f32 %v1382, %v1389
          %v1392 = vmul.f32 %v1390, 1.442695
          %v1393 = vpow.pop %v1392
          %v1394 = vmul.f32 %v1391, 1.442695
          %v1395 = vpow.pop %v1394
          %v1396 = vsel %vm713, %v1393, 0.0
          %1397 = vadd.xlane.f32.xlu0 %v1396
          %v1398 = vpop.xlane.xlu0 %1397
          %v1399 = vsel %vm713, %v1395, 0.0
          %1400 = vadd.xlane.f32.xlu0 %v1399
          %v1401 = vpop.xlane.xlu0 %1400
          %v1402 = vrcp.pop %v1398
          %v1403 = vrcp.pop %v1401
          %v1404 = vmul.f32 %v1393, %v1402
          %v1405 = vmul.f32 %v1395, %v1403
          %v1406 = vpack.c.bf16 %v1405, %v1404
          %1407 = vrot.lane.b32.xlu0 %v761, 16
          %v1408 = vpop.permute.xlu0 %1407
          %v1411 = vsel %vm713, %v1406, 0
          %1413 = vmatpush.bf16.msra.mxu0 0
          %1414 = vmatpush.bf16.msra.mxu0 0
          %1415 = vmatpush.bf16.msra.mxu0 0
          %1416 = vmatpush.bf16.msra.mxu0 0
          %1417 = vmatpush.bf16.msra.mxu0 0
          %1418 = vmatpush.bf16.msra.mxu0 0
          %1419 = vmatpush.bf16.msra.mxu0 0
          %1420 = vmatpush.bf16.msra.mxu0 %v1408
          %1421 = vmatmul.bf16.gmra.mxu0 %v1411
          %v1422 = vpop.f32.mrf.mxu0
          %v1423 = vadd.f32 0.0, %v1422
          %v1424 = vpop.f32.mrf.mxu0
          %v1425 = vadd.f32 0.0, %v1424
          %1426 = vdwg.mxu0
          %v1427 = vpack.c.bf16 %v1425, %v1423
          %v1430 = vunpack.c.l.b16 %v703
          %v1431 = vunpack.c.l.b16 %v704
          %v1432 = vpack.c.b16 %v1431, %v1430
          %v1435 = vsel %vm713, %v1427, 0
          %1437 = vmatpush.bf16.msra.mxu0 0
          %1438 = vmatpush.bf16.msra.mxu0 0
          %1439 = vmatpush.bf16.msra.mxu0 0
          %1440 = vmatpush.bf16.msra.mxu0 0
          %1441 = vmatpush.bf16.msra.mxu0 0
          %1442 = vmatpush.bf16.msra.mxu0 0
          %1443 = vmatpush.bf16.msra.mxu0 0
          %1444 = vmatpush.bf16.msra.mxu0 %v1432
          %1445 = vmatmul.bf16.gmra.mxu0 %v1435
          %v1446 = vpop.f32.mrf.mxu0
          %v1447 = vadd.f32 0.0, %v1446
          %v1448 = vpop.f32.mrf.mxu0
          %v1449 = vadd.f32 0.0, %v1448
          %1450 = vdwg.mxu0
          %v1451 = vadd.f32 %v1358, %v1447
          %v1452 = vadd.f32 %v1359, %v1449
          %v1453 = vadd.f32 %v411, %v1451
          %v1454 = vadd.f32 %v412, %v1452
          %v1455 = vperm.slane %v416, 5
          %v1456 = vadd.f32 %v1453, %v1455
          %v1457 = vadd.f32 %v1454, %v1455
          %1458 = vadd.xlane.f32.xlu0 %v1456
          %v1459 = vpop.xlane.xlu0 %1458
          %1460 = vadd.xlane.f32.xlu0 %v1457
          %v1461 = vpop.xlane.xlu0 %1460
          %v1462 = vmul.f32 %v1459, %v430
          %v1463 = vmul.f32 %v1461, %v430
          %v1464 = vsub.f32 %v1456, %v1462
          %v1465 = vsub.f32 %v1457, %v1463
          %v1466 = vmul.f32 %v1464, %v1464
          %v1467 = vmul.f32 %v1465, %v1465
          %1468 = vadd.xlane.f32.xlu0 %v1466
          %v1469 = vpop.xlane.xlu0 %1468
          %1470 = vadd.xlane.f32.xlu0 %v1467
          %v1471 = vpop.xlane.xlu0 %1470
          %v1472 = vmul.f32 %v1469, %v430
          %v1473 = vmul.f32 %v1471, %v430
          %v1474 = vadd.f32 %v1472, 1e-05
          %v1475 = vadd.f32 %v1473, 1e-05
          %v1476 = vrsqrt.pop %v1474
          %v1477 = vmul.f32 %v1476, %v1474
          %v1478 = vmul.f32 %v1477, %v1476
          %v1479 = vmul.f32 0.5, %v1478
          %v1480 = vsub.f32 1.5, %v1479
          %v1481 = vmul.f32 %v1476, %v1480
          %vm1482 = vweird.f32 %v1474
          %vm1483 = vweird.f32 %v1476
          %vm1484 = vmor %vm1482, %vm1483
          %v1485 = vsel %vm1484, %v1476, %v1481
          %v1486 = vrsqrt.pop %v1475
          %v1487 = vmul.f32 %v1486, %v1475
          %v1488 = vmul.f32 %v1487, %v1486
          %v1489 = vmul.f32 0.5, %v1488
          %v1490 = vsub.f32 1.5, %v1489
          %v1491 = vmul.f32 %v1486, %v1490
          %vm1492 = vweird.f32 %v1475
          %vm1493 = vweird.f32 %v1486
          %vm1494 = vmor %vm1492, %vm1493
          %v1495 = vsel %vm1494, %v1486, %v1491
          %v1496 = vmul.f32 %v1464, %v1485
          %v1497 = vmul.f32 %v1465, %v1495
          %v1498 = vperm.slane %v416, 2
          %v1499 = vmul.f32 %v1496, %v1498
          %v1500 = vmul.f32 %v1497, %v1498
          %v1501 = vperm.slane %v416, 3
          %v1502 = vadd.f32 %v1499, %v1501
          %v1503 = vadd.f32 %v1500, %v1501
          %v1504 = vpack.c.bf16 %v1503, %v1502
          %s1505 = smul.u32 %s406, 64
          %s1506 = smul.addr %s1505, 4
          %s1507 = scalar_lea.vmem [#allocation10], %s1506
          %v1508 = vld [vmem:[%s1507] sm:$0xff]
          %v1509 = vld [vmem:[%s1507 + $0x8] sm:$0xff]
          %v1510 = vld [vmem:[%s1507 + $0x10] sm:$0xff]
          %v1511 = vld [vmem:[%s1507 + $0x18] sm:$0xff]
          %v1512 = vld [vmem:[%s1507 + $0x20] sm:$0xff]
          %v1513 = vld [vmem:[%s1507 + $0x28] sm:$0xff]
          %v1514 = vld [vmem:[%s1507 + $0x30] sm:$0xff]
          %v1515 = vld [vmem:[%s1507 + $0x38] sm:$0xff]
          %v1516 = vld [vmem:[%s1507 + $0x40] sm:$0xff]
          %v1517 = vld [vmem:[%s1507 + $0x48] sm:$0xff]
          %v1518 = vld [vmem:[%s1507 + $0x50] sm:$0xff]
          %v1519 = vld [vmem:[%s1507 + $0x58] sm:$0xff]
          %v1520 = vld [vmem:[%s1507 + $0x60] sm:$0xff]
          %v1521 = vld [vmem:[%s1507 + $0x68] sm:$0xff]
          %v1522 = vld [vmem:[%s1507 + $0x70] sm:$0xff]
          %v1523 = vld [vmem:[%s1507 + $0x78] sm:$0xff]
          %v1524 = vld [vmem:[%s1507 + $0x80] sm:$0xff]
          %v1525 = vld [vmem:[%s1507 + $0x88] sm:$0xff]
          %v1526 = vld [vmem:[%s1507 + $0x90] sm:$0xff]
          %v1527 = vld [vmem:[%s1507 + $0x98] sm:$0xff]
          %v1528 = vld [vmem:[%s1507 + $0xa0] sm:$0xff]
          %v1529 = vld [vmem:[%s1507 + $0xa8] sm:$0xff]
          %v1530 = vld [vmem:[%s1507 + $0xb0] sm:$0xff]
          %v1531 = vld [vmem:[%s1507 + $0xb8] sm:$0xff]
          %v1532 = vld [vmem:[%s1507 + $0xc0] sm:$0xff]
          %v1533 = vld [vmem:[%s1507 + $0xc8] sm:$0xff]
          %v1534 = vld [vmem:[%s1507 + $0xd0] sm:$0xff]
          %v1535 = vld [vmem:[%s1507 + $0xd8] sm:$0xff]
          %v1536 = vld [vmem:[%s1507 + $0xe0] sm:$0xff]
          %v1537 = vld [vmem:[%s1507 + $0xe8] sm:$0xff]
          %v1538 = vld [vmem:[%s1507 + $0xf0] sm:$0xff]
          %v1539 = vld [vmem:[%s1507 + $0xf8] sm:$0xff]
          %v1540 = vperm.slane %v416, 6
          %v1541 = vperm.slane %v417, 6
          %v1542 = vperm.slane %v418, 6
          %v1543 = vperm.slane %v419, 6
          %v1576 = vunpack.c.l.b16 %v1508
          %v1577 = vunpack.c.h.b16 %v1508
          %v1578 = vunpack.c.l.b16 %v1509
          %v1579 = vunpack.c.h.b16 %v1509
          %v1580 = vunpack.c.l.b16 %v1510
          %v1581 = vunpack.c.h.b16 %v1510
          %v1582 = vunpack.c.l.b16 %v1511
          %v1583 = vunpack.c.h.b16 %v1511
          %v1584 = vunpack.c.l.b16 %v1512
          %v1585 = vunpack.c.h.b16 %v1512
          %v1586 = vunpack.c.l.b16 %v1513
          %v1587 = vunpack.c.h.b16 %v1513
          %v1588 = vunpack.c.l.b16 %v1514
          %v1589 = vunpack.c.h.b16 %v1514
          %v1590 = vunpack.c.l.b16 %v1515
          %v1591 = vunpack.c.h.b16 %v1515
          %v1592 = vunpack.c.l.b16 %v1516
          %v1593 = vunpack.c.h.b16 %v1516
          %v1594 = vunpack.c.l.b16 %v1517
          %v1595 = vunpack.c.h.b16 %v1517
          %v1596 = vunpack.c.l.b16 %v1518
          %v1597 = vunpack.c.h.b16 %v1518
          %v1598 = vunpack.c.l.b16 %v1519
          %v1599 = vunpack.c.h.b16 %v1519
          %v1600 = vunpack.c.l.b16 %v1520
          %v1601 = vunpack.c.h.b16 %v1520
          %v1602 = vunpack.c.l.b16 %v1521
          %v1603 = vunpack.c.h.b16 %v1521
          %v1604 = vunpack.c.l.b16 %v1522
          %v1605 = vunpack.c.h.b16 %v1522
          %v1606 = vunpack.c.l.b16 %v1523
          %v1607 = vunpack.c.h.b16 %v1523
          %v1608 = vunpack.c.l.b16 %v1524
          %v1609 = vunpack.c.h.b16 %v1524
          %v1610 = vunpack.c.l.b16 %v1525
          %v1611 = vunpack.c.h.b16 %v1525
          %v1612 = vunpack.c.l.b16 %v1526
          %v1613 = vunpack.c.h.b16 %v1526
          %v1614 = vunpack.c.l.b16 %v1527
          %v1615 = vunpack.c.h.b16 %v1527
          %v1616 = vunpack.c.l.b16 %v1528
          %v1617 = vunpack.c.h.b16 %v1528
          %v1618 = vunpack.c.l.b16 %v1529
          %v1619 = vunpack.c.h.b16 %v1529
          %v1620 = vunpack.c.l.b16 %v1530
          %v1621 = vunpack.c.h.b16 %v1530
          %v1622 = vunpack.c.l.b16 %v1531
          %v1623 = vunpack.c.h.b16 %v1531
          %v1624 = vunpack.c.l.b16 %v1532
          %v1625 = vunpack.c.h.b16 %v1532
          %v1626 = vunpack.c.l.b16 %v1533
          %v1627 = vunpack.c.h.b16 %v1533
          %v1628 = vunpack.c.l.b16 %v1534
          %v1629 = vunpack.c.h.b16 %v1534
          %v1630 = vunpack.c.l.b16 %v1535
          %v1631 = vunpack.c.h.b16 %v1535
          %v1632 = vunpack.c.l.b16 %v1536
          %v1633 = vunpack.c.h.b16 %v1536
          %v1634 = vunpack.c.l.b16 %v1537
          %v1635 = vunpack.c.h.b16 %v1537
          %v1636 = vunpack.c.l.b16 %v1538
          %v1637 = vunpack.c.h.b16 %v1538
          %v1638 = vunpack.c.l.b16 %v1539
          %v1639 = vunpack.c.h.b16 %v1539
          %v1640 = vpack.c.b16 %v1580, %v1576
          %v1641 = vpack.c.b16 %v1581, %v1577
          %v1642 = vpack.c.b16 %v1582, %v1578
          %v1643 = vpack.c.b16 %v1583, %v1579
          %v1644 = vpack.c.b16 %v1588, %v1584
          %v1645 = vpack.c.b16 %v1589, %v1585
          %v1646 = vpack.c.b16 %v1590, %v1586
          %v1647 = vpack.c.b16 %v1591, %v1587
          %v1648 = vpack.c.b16 %v1596, %v1592
          %v1649 = vpack.c.b16 %v1597, %v1593
          %v1650 = vpack.c.b16 %v1598, %v1594
          %v1651 = vpack.c.b16 %v1599, %v1595
          %v1652 = vpack.c.b16 %v1604, %v1600
          %v1653 = vpack.c.b16 %v1605, %v1601
          %v1654 = vpack.c.b16 %v1606, %v1602
          %v1655 = vpack.c.b16 %v1607, %v1603
          %v1656 = vpack.c.b16 %v1612, %v1608
          %v1657 = vpack.c.b16 %v1613, %v1609
          %v1658 = vpack.c.b16 %v1614, %v1610
          %v1659 = vpack.c.b16 %v1615, %v1611
          %v1660 = vpack.c.b16 %v1620, %v1616
          %v1661 = vpack.c.b16 %v1621, %v1617
          %v1662 = vpack.c.b16 %v1622, %v1618
          %v1663 = vpack.c.b16 %v1623, %v1619
          %v1664 = vpack.c.b16 %v1628, %v1624
          %v1665 = vpack.c.b16 %v1629, %v1625
          %v1666 = vpack.c.b16 %v1630, %v1626
          %v1667 = vpack.c.b16 %v1631, %v1627
          %v1668 = vpack.c.b16 %v1636, %v1632
          %v1669 = vpack.c.b16 %v1637, %v1633
          %v1670 = vpack.c.b16 %v1638, %v1634
          %v1671 = vpack.c.b16 %v1639, %v1635
          %1704 = vmatpush.bf16.msra.mxu0 %v1668
          %1705 = vmatpush.bf16.msra.mxu0 %v1664
          %1706 = vmatpush.bf16.msra.mxu0 %v1660
          %1707 = vmatpush.bf16.msra.mxu0 %v1656
          %1708 = vmatpush.bf16.msra.mxu0 %v1652
          %1709 = vmatpush.bf16.msra.mxu0 %v1648
          %1710 = vmatpush.bf16.msra.mxu0 %v1644
          %1711 = vmatpush.bf16.msra.mxu0 %v1640
          %1712 = vmatmul.bf16.gmra.mxu0 %v1504
          %v1713 = vpop.f32.mrf.mxu0
          %v1714 = vadd.f32 %v1540, %v1713
          %v1715 = vpop.f32.mrf.mxu0
          %v1716 = vadd.f32 %v1540, %v1715
          %1717 = vdwg.mxu0
          %1718 = vmatpush.bf16.msra.mxu0 %v1669
          %1719 = vmatpush.bf16.msra.mxu0 %v1665
          %1720 = vmatpush.bf16.msra.mxu0 %v1661
          %1721 = vmatpush.bf16.msra.mxu0 %v1657
          %1722 = vmatpush.bf16.msra.mxu0 %v1653
          %1723 = vmatpush.bf16.msra.mxu0 %v1649
          %1724 = vmatpush.bf16.msra.mxu0 %v1645
          %1725 = vmatpush.bf16.msra.mxu0 %v1641
          %1726 = vmatmul.bf16.gmra.mxu0 %v1504
          %v1727 = vpop.f32.mrf.mxu0
          %v1728 = vadd.f32 %v1541, %v1727
          %v1729 = vpop.f32.mrf.mxu0
          %v1730 = vadd.f32 %v1541, %v1729
          %1731 = vdwg.mxu0
          %1732 = vmatpush.bf16.msra.mxu0 %v1670
          %1733 = vmatpush.bf16.msra.mxu0 %v1666
          %1734 = vmatpush.bf16.msra.mxu0 %v1662
          %1735 = vmatpush.bf16.msra.mxu0 %v1658
          %1736 = vmatpush.bf16.msra.mxu0 %v1654
          %1737 = vmatpush.bf16.msra.mxu0 %v1650
          %1738 = vmatpush.bf16.msra.mxu0 %v1646
          %1739 = vmatpush.bf16.msra.mxu0 %v1642
          %1740 = vmatmul.bf16.gmra.mxu0 %v1504
          %v1741 = vpop.f32.mrf.mxu0
          %v1742 = vadd.f32 %v1542, %v1741
          %v1743 = vpop.f32.mrf.mxu0
          %v1744 = vadd.f32 %v1542, %v1743
          %1745 = vdwg.mxu0
          %1746 = vmatpush.bf16.msra.mxu0 %v1671
          %1747 = vmatpush.bf16.msra.mxu0 %v1667
          %1748 = vmatpush.bf16.msra.mxu0 %v1663
          %1749 = vmatpush.bf16.msra.mxu0 %v1659
          %1750 = vmatpush.bf16.msra.mxu0 %v1655
          %1751 = vmatpush.bf16.msra.mxu0 %v1651
          %1752 = vmatpush.bf16.msra.mxu0 %v1647
          %1753 = vmatpush.bf16.msra.mxu0 %v1643
          %1754 = vmatmul.bf16.gmra.mxu0 %v1504
          %v1755 = vpop.f32.mrf.mxu0
          %v1756 = vadd.f32 %v1543, %v1755
          %v1757 = vpop.f32.mrf.mxu0
          %v1758 = vadd.f32 %v1543, %v1757
          %1759 = vdwg.mxu0
          %v1760 = vmax.f32 %v1714, 0.0
          %v1761 = vmax.f32 %v1728, 0.0
          %v1762 = vmax.f32 %v1742, 0.0
          %v1763 = vmax.f32 %v1756, 0.0
          %v1764 = vmax.f32 %v1716, 0.0
          %v1765 = vmax.f32 %v1730, 0.0
          %v1766 = vmax.f32 %v1744, 0.0
          %v1767 = vmax.f32 %v1758, 0.0
          %v1768 = vpack.c.bf16 %v1764, %v1760
          %v1769 = vpack.c.bf16 %v1765, %v1761
          %v1770 = vpack.c.bf16 %v1766, %v1762
          %v1771 = vpack.c.bf16 %v1767, %v1763
          %s1772 = smul.addr %s1505, 4
          %s1773 = scalar_lea.vmem [#allocation11], %s1772
          %v1774 = vld [vmem:[%s1773] sm:$0xf]
          %v1775 = vld [vmem:[%s1773 + $0x4] sm:$0xf]
          %v1776 = vld [vmem:[%s1773 + $0x8] sm:$0xf]
          %v1777 = vld [vmem:[%s1773 + $0xc] sm:$0xf]
          %v1778 = vld [vmem:[%s1773 + $0x10] sm:$0xf]
          %v1779 = vld [vmem:[%s1773 + $0x14] sm:$0xf]
          %v1780 = vld [vmem:[%s1773 + $0x18] sm:$0xf]
          %v1781 = vld [vmem:[%s1773 + $0x1c] sm:$0xf]
          %v1782 = vld [vmem:[%s1773 + $0x20] sm:$0xf]
          %v1783 = vld [vmem:[%s1773 + $0x24] sm:$0xf]
          %v1784 = vld [vmem:[%s1773 + $0x28] sm:$0xf]
          %v1785 = vld [vmem:[%s1773 + $0x2c] sm:$0xf]
          %v1786 = vld [vmem:[%s1773 + $0x30] sm:$0xf]
          %v1787 = vld [vmem:[%s1773 + $0x34] sm:$0xf]
          %v1788 = vld [vmem:[%s1773 + $0x38] sm:$0xf]
          %v1789 = vld [vmem:[%s1773 + $0x3c] sm:$0xf]
          %v1790 = vld [vmem:[%s1773 + $0x40] sm:$0xf]
          %v1791 = vld [vmem:[%s1773 + $0x44] sm:$0xf]
          %v1792 = vld [vmem:[%s1773 + $0x48] sm:$0xf]
          %v1793 = vld [vmem:[%s1773 + $0x4c] sm:$0xf]
          %v1794 = vld [vmem:[%s1773 + $0x50] sm:$0xf]
          %v1795 = vld [vmem:[%s1773 + $0x54] sm:$0xf]
          %v1796 = vld [vmem:[%s1773 + $0x58] sm:$0xf]
          %v1797 = vld [vmem:[%s1773 + $0x5c] sm:$0xf]
          %v1798 = vld [vmem:[%s1773 + $0x60] sm:$0xf]
          %v1799 = vld [vmem:[%s1773 + $0x64] sm:$0xf]
          %v1800 = vld [vmem:[%s1773 + $0x68] sm:$0xf]
          %v1801 = vld [vmem:[%s1773 + $0x6c] sm:$0xf]
          %v1802 = vld [vmem:[%s1773 + $0x70] sm:$0xf]
          %v1803 = vld [vmem:[%s1773 + $0x74] sm:$0xf]
          %v1804 = vld [vmem:[%s1773 + $0x78] sm:$0xf]
          %v1805 = vld [vmem:[%s1773 + $0x7c] sm:$0xf]
          %v1806 = vld [vmem:[%s1773 + $0x80] sm:$0xf]
          %v1807 = vld [vmem:[%s1773 + $0x84] sm:$0xf]
          %v1808 = vld [vmem:[%s1773 + $0x88] sm:$0xf]
          %v1809 = vld [vmem:[%s1773 + $0x8c] sm:$0xf]
          %v1810 = vld [vmem:[%s1773 + $0x90] sm:$0xf]
          %v1811 = vld [vmem:[%s1773 + $0x94] sm:$0xf]
          %v1812 = vld [vmem:[%s1773 + $0x98] sm:$0xf]
          %v1813 = vld [vmem:[%s1773 + $0x9c] sm:$0xf]
          %v1814 = vld [vmem:[%s1773 + $0xa0] sm:$0xf]
          %v1815 = vld [vmem:[%s1773 + $0xa4] sm:$0xf]
          %v1816 = vld [vmem:[%s1773 + $0xa8] sm:$0xf]
          %v1817 = vld [vmem:[%s1773 + $0xac] sm:$0xf]
          %v1818 = vld [vmem:[%s1773 + $0xb0] sm:$0xf]
          %v1819 = vld [vmem:[%s1773 + $0xb4] sm:$0xf]
          %v1820 = vld [vmem:[%s1773 + $0xb8] sm:$0xf]
          %v1821 = vld [vmem:[%s1773 + $0xbc] sm:$0xf]
          %v1822 = vld [vmem:[%s1773 + $0xc0] sm:$0xf]
          %v1823 = vld [vmem:[%s1773 + $0xc4] sm:$0xf]
          %v1824 = vld [vmem:[%s1773 + $0xc8] sm:$0xf]
          %v1825 = vld [vmem:[%s1773 + $0xcc] sm:$0xf]
          %v1826 = vld [vmem:[%s1773 + $0xd0] sm:$0xf]
          %v1827 = vld [vmem:[%s1773 + $0xd4] sm:$0xf]
          %v1828 = vld [vmem:[%s1773 + $0xd8] sm:$0xf]
          %v1829 = vld [vmem:[%s1773 + $0xdc] sm:$0xf]
          %v1830 = vld [vmem:[%s1773 + $0xe0] sm:$0xf]
          %v1831 = vld [vmem:[%s1773 + $0xe4] sm:$0xf]
          %v1832 = vld [vmem:[%s1773 + $0xe8] sm:$0xf]
          %v1833 = vld [vmem:[%s1773 + $0xec] sm:$0xf]
          %v1834 = vld [vmem:[%s1773 + $0xf0] sm:$0xf]
          %v1835 = vld [vmem:[%s1773 + $0xf4] sm:$0xf]
          %v1836 = vld [vmem:[%s1773 + $0xf8] sm:$0xf]
          %v1837 = vld [vmem:[%s1773 + $0xfc] sm:$0xf]
          %v1838 = vperm.slane %v416, 7
          %v1903 = vunpack.c.l.b16 %v1774
          %v1904 = vunpack.c.l.b16 %v1775
          %v1905 = vunpack.c.l.b16 %v1776
          %v1906 = vunpack.c.l.b16 %v1777
          %v1907 = vunpack.c.l.b16 %v1778
          %v1908 = vunpack.c.l.b16 %v1779
          %v1909 = vunpack.c.l.b16 %v1780
          %v1910 = vunpack.c.l.b16 %v1781
          %v1911 = vunpack.c.l.b16 %v1782
          %v1912 = vunpack.c.l.b16 %v1783
          %v1913 = vunpack.c.l.b16 %v1784
          %v1914 = vunpack.c.l.b16 %v1785
          %v1915 = vunpack.c.l.b16 %v1786
          %v1916 = vunpack.c.l.b16 %v1787
          %v1917 = vunpack.c.l.b16 %v1788
          %v1918 = vunpack.c.l.b16 %v1789
          %v1919 = vunpack.c.l.b16 %v1790
          %v1920 = vunpack.c.l.b16 %v1791
          %v1921 = vunpack.c.l.b16 %v1792
          %v1922 = vunpack.c.l.b16 %v1793
          %v1923 = vunpack.c.l.b16 %v1794
          %v1924 = vunpack.c.l.b16 %v1795
          %v1925 = vunpack.c.l.b16 %v1796
          %v1926 = vunpack.c.l.b16 %v1797
          %v1927 = vunpack.c.l.b16 %v1798
          %v1928 = vunpack.c.l.b16 %v1799
          %v1929 = vunpack.c.l.b16 %v1800
          %v1930 = vunpack.c.l.b16 %v1801
          %v1931 = vunpack.c.l.b16 %v1802
          %v1932 = vunpack.c.l.b16 %v1803
          %v1933 = vunpack.c.l.b16 %v1804
          %v1934 = vunpack.c.l.b16 %v1805
          %v1935 = vunpack.c.l.b16 %v1806
          %v1936 = vunpack.c.l.b16 %v1807
          %v1937 = vunpack.c.l.b16 %v1808
          %v1938 = vunpack.c.l.b16 %v1809
          %v1939 = vunpack.c.l.b16 %v1810
          %v1940 = vunpack.c.l.b16 %v1811
          %v1941 = vunpack.c.l.b16 %v1812
          %v1942 = vunpack.c.l.b16 %v1813
          %v1943 = vunpack.c.l.b16 %v1814
          %v1944 = vunpack.c.l.b16 %v1815
          %v1945 = vunpack.c.l.b16 %v1816
          %v1946 = vunpack.c.l.b16 %v1817
          %v1947 = vunpack.c.l.b16 %v1818
          %v1948 = vunpack.c.l.b16 %v1819
          %v1949 = vunpack.c.l.b16 %v1820
          %v1950 = vunpack.c.l.b16 %v1821
          %v1951 = vunpack.c.l.b16 %v1822
          %v1952 = vunpack.c.l.b16 %v1823
          %v1953 = vunpack.c.l.b16 %v1824
          %v1954 = vunpack.c.l.b16 %v1825
          %v1955 = vunpack.c.l.b16 %v1826
          %v1956 = vunpack.c.l.b16 %v1827
          %v1957 = vunpack.c.l.b16 %v1828
          %v1958 = vunpack.c.l.b16 %v1829
          %v1959 = vunpack.c.l.b16 %v1830
          %v1960 = vunpack.c.l.b16 %v1831
          %v1961 = vunpack.c.l.b16 %v1832
          %v1962 = vunpack.c.l.b16 %v1833
          %v1963 = vunpack.c.l.b16 %v1834
          %v1964 = vunpack.c.l.b16 %v1835
          %v1965 = vunpack.c.l.b16 %v1836
          %v1966 = vunpack.c.l.b16 %v1837
          %v1967 = vpack.c.b16 %v1904, %v1903
          %v1968 = vpack.c.b16 %v1906, %v1905
          %v1969 = vpack.c.b16 %v1908, %v1907
          %v1970 = vpack.c.b16 %v1910, %v1909
          %v1971 = vpack.c.b16 %v1912, %v1911
          %v1972 = vpack.c.b16 %v1914, %v1913
          %v1973 = vpack.c.b16 %v1916, %v1915
          %v1974 = vpack.c.b16 %v1918, %v1917
          %v1975 = vpack.c.b16 %v1920, %v1919
          %v1976 = vpack.c.b16 %v1922, %v1921
          %v1977 = vpack.c.b16 %v1924, %v1923
          %v1978 = vpack.c.b16 %v1926, %v1925
          %v1979 = vpack.c.b16 %v1928, %v1927
          %v1980 = vpack.c.b16 %v1930, %v1929
          %v1981 = vpack.c.b16 %v1932, %v1931
          %v1982 = vpack.c.b16 %v1934, %v1933
          %v1983 = vpack.c.b16 %v1936, %v1935
          %v1984 = vpack.c.b16 %v1938, %v1937
          %v1985 = vpack.c.b16 %v1940, %v1939
          %v1986 = vpack.c.b16 %v1942, %v1941
          %v1987 = vpack.c.b16 %v1944, %v1943
          %v1988 = vpack.c.b16 %v1946, %v1945
          %v1989 = vpack.c.b16 %v1948, %v1947
          %v1990 = vpack.c.b16 %v1950, %v1949
          %v1991 = vpack.c.b16 %v1952, %v1951
          %v1992 = vpack.c.b16 %v1954, %v1953
          %v1993 = vpack.c.b16 %v1956, %v1955
          %v1994 = vpack.c.b16 %v1958, %v1957
          %v1995 = vpack.c.b16 %v1960, %v1959
          %v1996 = vpack.c.b16 %v1962, %v1961
          %v1997 = vpack.c.b16 %v1964, %v1963
          %v1998 = vpack.c.b16 %v1966, %v1965
          %2031 = vmatpush.bf16.msra.mxu0 %v1974
          %2032 = vmatpush.bf16.msra.mxu0 %v1973
          %2033 = vmatpush.bf16.msra.mxu0 %v1972
          %2034 = vmatpush.bf16.msra.mxu0 %v1971
          %2035 = vmatpush.bf16.msra.mxu0 %v1970
          %2036 = vmatpush.bf16.msra.mxu0 %v1969
          %2037 = vmatpush.bf16.msra.mxu0 %v1968
          %2038 = vmatpush.bf16.msra.mxu0 %v1967
          %2039 = vmatmul.bf16.gmra.mxu0 %v1768
          %v2040 = vpop.f32.mrf.mxu0
          %v2041 = vadd.f32 %v1838, %v2040
          %v2042 = vpop.f32.mrf.mxu0
          %v2043 = vadd.f32 %v1838, %v2042
          %2044 = vdwg.mxu0
          %2045 = vmatpush.bf16.msra.mxu0 %v1982
          %2046 = vmatpush.bf16.msra.mxu0 %v1981
          %2047 = vmatpush.bf16.msra.mxu0 %v1980
          %2048 = vmatpush.bf16.msra.mxu0 %v1979
          %2049 = vmatpush.bf16.msra.mxu0 %v1978
          %2050 = vmatpush.bf16.msra.mxu0 %v1977
          %2051 = vmatpush.bf16.msra.mxu0 %v1976
          %2052 = vmatpush.bf16.msra.mxu0 %v1975
          %2053 = vmatmul.bf16.gmra.mxu0 %v1769
          %v2054 = vpop.f32.mrf.mxu0
          %v2055 = vadd.f32 %v2041, %v2054
          %v2056 = vpop.f32.mrf.mxu0
          %v2057 = vadd.f32 %v2043, %v2056
          %2058 = vdwg.mxu0
          %2059 = vmatpush.bf16.msra.mxu0 %v1990
          %2060 = vmatpush.bf16.msra.mxu0 %v1989
          %2061 = vmatpush.bf16.msra.mxu0 %v1988
          %2062 = vmatpush.bf16.msra.mxu0 %v1987
          %2063 = vmatpush.bf16.msra.mxu0 %v1986
          %2064 = vmatpush.bf16.msra.mxu0 %v1985
          %2065 = vmatpush.bf16.msra.mxu0 %v1984
          %2066 = vmatpush.bf16.msra.mxu0 %v1983
          %2067 = vmatmul.bf16.gmra.mxu0 %v1770
          %v2068 = vpop.f32.mrf.mxu0
          %v2069 = vadd.f32 %v2055, %v2068
          %v2070 = vpop.f32.mrf.mxu0
          %v2071 = vadd.f32 %v2057, %v2070
          %2072 = vdwg.mxu0
          %2073 = vmatpush.bf16.msra.mxu0 %v1998
          %2074 = vmatpush.bf16.msra.mxu0 %v1997
          %2075 = vmatpush.bf16.msra.mxu0 %v1996
          %2076 = vmatpush.bf16.msra.mxu0 %v1995
          %2077 = vmatpush.bf16.msra.mxu0 %v1994
          %2078 = vmatpush.bf16.msra.mxu0 %v1993
          %2079 = vmatpush.bf16.msra.mxu0 %v1992
          %2080 = vmatpush.bf16.msra.mxu0 %v1991
          %2081 = vmatmul.bf16.gmra.mxu0 %v1771
          %v2082 = vpop.f32.mrf.mxu0
          %v2083 = vadd.f32 %v2069, %v2082
          %v2084 = vpop.f32.mrf.mxu0
          %v2085 = vadd.f32 %v2071, %v2084
          %2086 = vdwg.mxu0
          %v2087 = vadd.f32 %v1456, %v2083
          %v2088 = vadd.f32 %v1457, %v2085
        $region77: #{attn_module_forward.1} parent=47 // loop_footer
          %s410 = sadd.s32 1, %s406
        $region78: #{attn_module_forward.1} parent=47 // loop_footer_branch
          %405 = sbr.rel target = $region74
        $region79: #{attn_module_forward.1} parent=47 // loop_exit
          _
        %2089 = vst [vmem:[%s392] sm:$0xff] %v411
        %2090 = vst [vmem:[%s392 + $0x8] sm:$0xff] %v412
        %s2091 = sand.u32 %s192, 1
        %s2092 = scalar_lea.sflag [#allocation4], %s2091
        %s2093 = sand.u32 %s192, 1
        %s2094 = smul.addr %s2093, 16
        %s2095 = scalar_lea.vmem [#allocation13], %s2094
        // Predicated region
        $region80: #{attn_module_forward.1} parent=47 // pred_check
          %p2096 = pneg %p202
        $region81: #{attn_module_forward.1} parent=47 // pred_check_branch
          %2098 = sbr.rel (%p2096) target = $region83
        $region82: #{attn_module_forward.1} parent=47 // pred_region
          %2100 = vsyncadd %s2092, 0
          %s2101 = smul.addr %s27, 2
          %s2102 = smul.addr %s2101, 8
          %s2103 = scalar_lea.hbm %s7, %s2102
          %s2104 = sshll.u32 %s2095, 4
          %s2105 = int_to_ptr.vmem [resolvable:$true] %s2104
          %s2106 = sshll.u32 %s2103, 4
          %s2107 = int_to_ptr.hbm [resolvable:$true] %s2106
          %2112 = dma.vmem_to_hbm [thread:$0]  %s2105, 256, %s2107, %s2092, 128, 128, 8
        $region83: #{attn_module_forward.1} parent=47 // pred_fallthru
          _
      $region48: #{attn_module_forward.1} parent=5 // pred_fallthru
        _
      %p2113 = scmp.le.s32.totalorder 2, %s22
      // Predicated region
      $region84: #{attn_module_forward.1} parent=5 // pred_check
        %p2114 = pneg %p2113
      $region85: #{attn_module_forward.1} parent=5 // pred_check_branch
        %2116 = sbr.rel (%p2114) target = $region87
      $region86: #{attn_module_forward.1} parent=5 // pred_region
        %s2117 = ssub.s32 %s22, 2
        // Predicated region
        $region88: #{attn_module_forward.1} parent=86 // pred_check
          %p2118 = pneg %p208
        $region89: #{attn_module_forward.1} parent=86 // pred_check_branch
          %2120 = sbr.rel (%p2118) target = $region91
        $region90: #{attn_module_forward.1} parent=86 // pred_region
          %s2121 = sand.u32 %s193, 1
          %s2122 = scalar_lea.sflag [#allocation4], %s2121
          %s2123 = sand.u32 %s193, 1
          %s2124 = smul.addr %s2123, 16
          %s2125 = scalar_lea.vmem [#allocation13], %s2124
          %2127 = dma.done %s2122, 256
        $region91: #{attn_module_forward.1} parent=86 // pred_fallthru
          _
      $region87: #{attn_module_forward.1} parent=5 // pred_fallthru
        _
    $region6: #{attn_module_forward.1} parent=1 // loop_footer
      %s26 = sadd.s32 1, %s22
    $region7: #{attn_module_forward.1} parent=1 // loop_footer_branch
      %21 = sbr.rel target = $region3
    $region8: #{attn_module_forward.1} parent=1 // loop_exit
      _
    %2128 = vsyncpa [#allocation3], 1
    %s2129 = scalar_lea.sflag [#allocation3], 1
    %2130 = vsyncpa %s2129, 1
    %2131 = vsyncpa [#allocation6], 1
    %2132 = vsyncpa [#allocation9], 1
    %2133 = vsyncpa [#allocation12], 1
    %2134 = vsyncpa [#allocation4], 1
    %s2135 = scalar_lea.sflag [#allocation4], 1
    %2136 = vsyncpa %s2135, 1

</llo_original>
